<compile_context>
chip_gen: v6e
topology: v6e:2x2x1
jax: 0.10.0
libtpu: 0.0.40
codegen_flags: <defaults>
</compile_context>

<pallas_src>
import jax
import jax.numpy as jnp
import numpy as np
from jax.experimental import pallas as pl
from jax.experimental.pallas import tpu as pltpu

_EPS = 1e-5


# --------------------------- in-kernel helpers ------------------------------
def _bn_relu(x, gamma, beta, inv_l):
    """Training-mode BatchNorm (stats over lanes = N*H*W per channel) + ReLU.

    x: (Cx, L); gamma, beta: (Cx, 1)."""
    mean = jnp.sum(x, axis=1, keepdims=True) * inv_l
    d = x - mean
    var = jnp.sum(d * d, axis=1, keepdims=True) * inv_l        # biased variance
    scale = gamma * jax.lax.rsqrt(var + _EPS)
    return jnp.maximum(d * scale + beta, 0.0)


def _conv1x1(x, w_ref, cb_ref):
    """1x1 conv.  x: (Cin, L); w_ref block (1, Cout, Cin); cb_ref (1, Cout, 1)."""
    wt = w_ref[0]                                  # (Cout, Cin)
    cin = x.shape[0]
    acc = x[0:1, :] * wt[:, 0:1]                   # (1,L)*(Cout,1) -> (Cout,L)
    for c in range(1, cin):
        acc = acc + x[c:c + 1, :] * wt[:, c:c + 1]
    return acc + cb_ref[0]


def _conv3x3(y, w2_ref, cb2_ref, mask_ref, W, L):
    """3x3 'same' conv in the (channels, N*H*W) layout.

    y: (C2, L); w2_ref block (1, 9, Cout, Cin) tap-major (tap = ky*3+kx);
    mask_ref: (9, L) validity mask per tap; cb2_ref: (1, C2, 1)."""
    cin = y.shape[0]
    zpad = jnp.zeros((cin, W + 1), dtype=y.dtype)
    ypad = jnp.concatenate([zpad, y, zpad], axis=1)            # (cin, L + 2W + 2)
    acc = None
    tap = 0
    for dy in (-1, 0, 1):
        for dx in (-1, 0, 1):
            off = dy * W + dx
            start = (W + 1) + off
            shifted = ypad[:, start:start + L]                 # shifted[l] = y[l+off] (0 outside)
            if dy != 0 or dx != 0:
                shifted = shifted * mask_ref[tap:tap + 1, :]   # zero invalid taps
            wt = w2_ref[0, tap]                                # (Cout, Cin)
            for c in range(cin):
                t = shifted[c:c + 1, :] * wt[:, c:c + 1]
                acc = t if acc is None else acc + t
            tap += 1
    return acc + cb2_ref[0]


# ----------------------------- kernel builder --------------------------------
def _build_residual_block_call(N, H, W, C, num_blocks):
    C2 = C // 2
    L = N * H * W
    inv_l = 1.0 / float(L)

    def kernel(mask_ref, x_ref,
               g1_ref, b1_ref, w1_ref, cb1_ref,
               g2_ref, b2_ref, w2_ref, cb2_ref,
               g3_ref, b3_ref, w3_ref, cb3_ref,
               o_ref, act_ref):
        blk = pl.program_id(0)

        # Load the input once; the activation stays resident in VMEM scratch.
        @pl.when(blk == 0)
        def _():
            act_ref[...] = x_ref[...]

        x = act_ref[...]                                        # (C, L)

        y1 = _bn_relu(x, g1_ref[0], b1_ref[0], inv_l)           # (C, L)
        h1 = _conv1x1(y1, w1_ref, cb1_ref)                      # (C2, L)
        y2 = _bn_relu(h1, g2_ref[0], b2_ref[0], inv_l)          # (C2, L)
        h2 = _conv3x3(y2, w2_ref, cb2_ref, mask_ref, W, L)      # (C2, L)
        y3 = _bn_relu(h2, g3_ref[0], b3_ref[0], inv_l)          # (C2, L)
        h3 = _conv1x1(y3, w3_ref, cb3_ref)                      # (C, L)

        out = h3 + x                                            # identity skip
        act_ref[...] = out

        # Single HBM writeback, after the last mini-block.
        @pl.when(blk == pl.num_programs(0) - 1)
        def _():
            o_ref[...] = out

    def whole(shape):
        zeros = (0,) * len(shape)
        return pl.BlockSpec(shape, lambda b: zeros)

    def per_block(shape_tail):
        zeros = (0,) * len(shape_tail)
        return pl.BlockSpec((1,) + tuple(shape_tail), lambda b: (b,) + zeros)

    in_specs = [
        whole((9, L)),                                   # conv boundary masks
        whole((C, L)),                                   # x (loaded once)
        per_block((C, 1)), per_block((C, 1)),            # bn1 gamma, beta
        per_block((C2, C)), per_block((C2, 1)),          # w1^T, conv bias 1
        per_block((C2, 1)), per_block((C2, 1)),          # bn2 gamma, beta
        per_block((9, C2, C2)), per_block((C2, 1)),      # w2 (tap, cout, cin), bias 2
        per_block((C2, 1)), per_block((C2, 1)),          # bn3 gamma, beta
        per_block((C, C2)), per_block((C, 1)),           # w3^T, conv bias 3
    ]

    return pl.pallas_call(
        kernel,
        out_shape=jax.ShapeDtypeStruct((C, L), jnp.float32),
        grid_spec=pltpu.PrefetchScalarGridSpec(
            num_scalar_prefetch=0,
            grid=(num_blocks,),
            in_specs=in_specs,
            out_specs=whole((C, L)),
            scratch_shapes=[pltpu.VMEM((C, L), jnp.float32)],
        ),
        compiler_params=pltpu.CompilerParams(
            dimension_semantics=("arbitrary",)),   # blocks are sequentially dependent
    )


# ------------------------------ host wrapper ---------------------------------
def _conv_mask(N, H, W):
    """(9, L) float mask: tap (dy,dx) valid at flattened position l=n*H*W+h*W+w."""
    L = N * H * W
    l = np.arange(L)
    h = (l // W) % H
    w = l % W
    rows = []
    for dy in (-1, 0, 1):
        for dx in (-1, 0, 1):
            valid = (h + dy >= 0) & (h + dy < H) & (w + dx >= 0) & (w + dx < W)
            rows.append(valid.astype(np.float32))
    return jnp.asarray(np.stack(rows, axis=0))


def init_params(key, num_channels, num_blocks):
    """Deterministic synthetic parameters for `num_blocks` MiniResidualBlocks."""
    C = num_channels
    C2 = C // 2
    params = []
    for i in range(num_blocks):
        ks = jax.random.split(jax.random.fold_in(key, i), 12)
        p = {
            "g1": jax.random.uniform(ks[0], (C,), jnp.float32, 0.5, 1.5),
            "b1": 0.1 * jax.random.normal(ks[1], (C,), jnp.float32),
            "w1": jax.random.normal(ks[2], (C, C2), jnp.float32) / np.sqrt(C),
            "cb1": 0.05 * jax.random.normal(ks[3], (C2,), jnp.float32),
            "g2": jax.random.uniform(ks[4], (C2,), jnp.float32, 0.5, 1.5),
            "b2": 0.1 * jax.random.normal(ks[5], (C2,), jnp.float32),
            "w2": jax.random.normal(ks[6], (3, 3, C2, C2), jnp.float32) / np.sqrt(9 * C2),  # HWIO
            "cb2": 0.05 * jax.random.normal(ks[7], (C2,), jnp.float32),
            "g3": jax.random.uniform(ks[8], (C2,), jnp.float32, 0.5, 1.5),
            "b3": 0.1 * jax.random.normal(ks[9], (C2,), jnp.float32),
            "w3": jax.random.normal(ks[10], (C2, C), jnp.float32) / np.sqrt(C2),
            "cb3": 0.05 * jax.random.normal(ks[11], (C,), jnp.float32),
        }
        params.append(p)
    return params


def residual_block_forward(x_nchw, params):
    """ResidualBlock forward: sequential MiniResidualBlocks, one pallas_call."""
    x_nchw = x_nchw.astype(jnp.float32)
    N, C, H, W = x_nchw.shape
    C2 = C // 2
    L = N * H * W
    B = len(params)

    # NCHW -> channels-on-sublanes, (n, h, w) flattened onto lanes.
    x_cl = jnp.transpose(x_nchw, (1, 0, 2, 3)).reshape(C, L)
    mask = _conv_mask(N, H, W)

    def stk(fn):
        return jnp.stack([fn(p) for p in params], axis=0)

    g1 = stk(lambda p: p["g1"].reshape(C, 1))
    b1 = stk(lambda p: p["b1"].reshape(C, 1))
    w1t = stk(lambda p: p["w1"].T)                                         # (B, C2, C)
    cb1 = stk(lambda p: p["cb1"].reshape(C2, 1))
    g2 = stk(lambda p: p["g2"].reshape(C2, 1))
    b2 = stk(lambda p: p["b2"].reshape(C2, 1))
    w2t = stk(lambda p: jnp.transpose(p["w2"].reshape(9, C2, C2), (0, 2, 1)))  # (B,9,Cout,Cin)
    cb2 = stk(lambda p: p["cb2"].reshape(C2, 1))
    g3 = stk(lambda p: p["g3"].reshape(C2, 1))
    b3 = stk(lambda p: p["b3"].reshape(C2, 1))
    w3t = stk(lambda p: p["w3"].T)                                         # (B, C, C2)
    cb3 = stk(lambda p: p["cb3"].reshape(C, 1))

    pc = _build_residual_block_call(N, H, W, C, B)
    out_cl = pc(mask, x_cl, g1, b1, w1t, cb1, g2, b2, w2t, cb2, g3, b3, w3t, cb3)

    return jnp.transpose(out_cl.reshape(C, N, H, W), (1, 0, 2, 3))         # -> NCHW


# ---------------- pure-JAX reference (for verification only) ----------------
def _ref_bn_relu(x, gamma, beta):
    mean = jnp.mean(x, axis=(0, 1, 2), keepdims=True)
    var = jnp.mean((x - mean) ** 2, axis=(0, 1, 2), keepdims=True)
    y = (x - mean) * jax.lax.rsqrt(var + _EPS) * gamma.reshape(1, 1, 1, -1) \
        + beta.reshape(1, 1, 1, -1)
    return jnp.maximum(y, 0.0)


def _ref_mini_block(x, p):
    y1 = _ref_bn_relu(x, p["g1"], p["b1"])
    h1 = jnp.einsum("nhwc,cd->nhwd", y1, p["w1"]) + p["cb1"].reshape(1, 1, 1, -1)
    y2 = _ref_bn_relu(h1, p["g2"], p["b2"])
    h2 = jax.lax.conv_general_dilated(
        y2, p["w2"], (1, 1), "SAME",
        dimension_numbers=("NHWC", "HWIO", "NHWC")) + p["cb2"].reshape(1, 1, 1, -1)
    y3 = _ref_bn_relu(h2, p["g3"], p["b3"])
    h3 = jnp.einsum("nhwc,cd->nhwd", y3, p["w3"]) + p["cb3"].reshape(1, 1, 1, -1)
    return h3 + x


def _reference(x_nchw, params):
    x = jnp.transpose(x_nchw, (0, 2, 3, 1)).astype(jnp.float32)
    for p in params:
        x = _ref_mini_block(x, p)
    return jnp.transpose(x, (0, 3, 1, 2))


if __name__ == "__main__":
    key = jax.random.PRNGKey(0)
    N, C, H, W = 2, 4, 16, 16
    num_blocks = 2

    kx, kp = jax.random.split(key)
    x = jax.random.normal(kx, (N, C, H, W), jnp.float32)
    params = init_params(kp, C, num_blocks)

    out = jax.block_until_ready(residual_block_forward(x, params))
    assert out.shape == (N, C, H, W)

    ref = jax.block_until_ready(_reference(x, params))
    np.testing.assert_allclose(np.asarray(out), np.asarray(ref),
                               rtol=1e-4, atol=1e-4)

    print("KERNEL_OK")
</pallas_src>

<mosaic_0001>
module attributes {stable_mosaic.version = 11 : i64} {
  func.func @kernel(%arg0: i32, %arg1: memref<9x512xf32, #tpu.memory_space<vmem>>, %arg2: memref<4x512xf32, #tpu.memory_space<vmem>>, %arg3: memref<1x4x1xf32, #tpu.memory_space<vmem>>, %arg4: memref<1x4x1xf32, #tpu.memory_space<vmem>>, %arg5: memref<1x2x4xf32, #tpu.memory_space<vmem>>, %arg6: memref<1x2x1xf32, #tpu.memory_space<vmem>>, %arg7: memref<1x2x1xf32, #tpu.memory_space<vmem>>, %arg8: memref<1x2x1xf32, #tpu.memory_space<vmem>>, %arg9: memref<1x9x2x2xf32, #tpu.memory_space<vmem>>, %arg10: memref<1x2x1xf32, #tpu.memory_space<vmem>>, %arg11: memref<1x2x1xf32, #tpu.memory_space<vmem>>, %arg12: memref<1x2x1xf32, #tpu.memory_space<vmem>>, %arg13: memref<1x4x2xf32, #tpu.memory_space<vmem>>, %arg14: memref<1x4x1xf32, #tpu.memory_space<vmem>>, %arg15: memref<4x512xf32, #tpu.memory_space<vmem>>, %arg16: memref<4x512xf32, #tpu.memory_space<vmem>>) attributes {dimension_semantics = [#tpu.dimension_semantics<arbitrary>], iteration_bounds = array<i64: 2>, scalar_prefetch = 0 : i64, scratch_operands = 1 : i64, tpu.core_type = #tpu.core_type<tc>, window_params = [{pipeline_mode = #tpu.pipeline_mode<synchronous>, transform_indices = @transform_0, window_bounds = array<i64: 9, 512>}, {pipeline_mode = #tpu.pipeline_mode<synchronous>, transform_indices = @transform_1, window_bounds = array<i64: 4, 512>}, {transform_indices = @transform_2, window_bounds = array<i64: 1, 4, 1>}, {transform_indices = @transform_3, window_bounds = array<i64: 1, 4, 1>}, {transform_indices = @transform_4, window_bounds = array<i64: 1, 2, 4>}, {transform_indices = @transform_5, window_bounds = array<i64: 1, 2, 1>}, {transform_indices = @transform_6, window_bounds = array<i64: 1, 2, 1>}, {transform_indices = @transform_7, window_bounds = array<i64: 1, 2, 1>}, {transform_indices = @transform_8, window_bounds = array<i64: 1, 9, 2, 2>}, {transform_indices = @transform_9, window_bounds = array<i64: 1, 2, 1>}, {transform_indices = @transform_10, window_bounds = array<i64: 1, 2, 1>}, {transform_indices = @transform_11, window_bounds = array<i64: 1, 2, 1>}, {transform_indices = @transform_12, window_bounds = array<i64: 1, 4, 2>}, {transform_indices = @transform_13, window_bounds = array<i64: 1, 4, 1>}, {pipeline_mode = #tpu.pipeline_mode<synchronous>, transform_indices = @transform_14, window_bounds = array<i64: 4, 512>}]} {
    %c0_i32 = arith.constant 0 : i32
    %0 = arith.cmpi eq, %arg0, %c0_i32 : i32
    %1 = arith.extui %0 : i1 to i32
    %c0_i32_0 = arith.constant 0 : i32
    %2 = arith.cmpi ne, %1, %c0_i32_0 : i32
    scf.if %2 {
      %c0_100 = arith.constant 0 : index
      %c0_101 = arith.constant 0 : index
      %294 = vector.load %arg2[%c0_100, %c0_101] : memref<4x512xf32, #tpu.memory_space<vmem>>, vector<4x512xf32>
      %c0_102 = arith.constant 0 : index
      %c0_103 = arith.constant 0 : index
      %295 = vector.load %arg16[%c0_102, %c0_103] : memref<4x512xf32, #tpu.memory_space<vmem>>, vector<4x512xf32>
      tpu.vector_store %arg16[%c0_102, %c0_103], %294 {strides = array<i32>} : memref<4x512xf32, #tpu.memory_space<vmem>>, vector<4x512xf32>,
    } else {
    }
    %c0 = arith.constant 0 : index
    %c0_1 = arith.constant 0 : index
    %3 = vector.load %arg16[%c0, %c0_1] : memref<4x512xf32, #tpu.memory_space<vmem>>, vector<4x512xf32>
    %c0_2 = arith.constant 0 : index
    %c0_3 = arith.constant 0 : index
    %c0_4 = arith.constant 0 : index
    %4 = vector.load %arg3[%c0_2, %c0_3, %c0_4] : memref<1x4x1xf32, #tpu.memory_space<vmem>>, vector<1x4x1xf32>
    %5 = vector.shape_cast %4 : vector<1x4x1xf32> to vector<4x1xf32>
    %c0_5 = arith.constant 0 : index
    %c0_6 = arith.constant 0 : index
    %c0_7 = arith.constant 0 : index
    %6 = vector.load %arg4[%c0_5, %c0_6, %c0_7] : memref<1x4x1xf32, #tpu.memory_space<vmem>>, vector<1x4x1xf32>
    %7 = vector.shape_cast %6 : vector<1x4x1xf32> to vector<4x1xf32>
    %cst = arith.constant dense<0.000000e+00> : vector<4xf32>
    %8 = vector.multi_reduction <add>, %3, %cst [1] : vector<4x512xf32> to vector<4xf32>
    %9 = vector.shape_cast %8 : vector<4xf32> to vector<4x1xf32>
    %cst_8 = arith.constant 0.001953125 : f32
    %10 = vector.broadcast %cst_8 : f32 to vector<4x1xf32>
    %11 = arith.mulf %9, %10 : vector<4x1xf32>
    %12 = vector.broadcast %11 : vector<4x1xf32> to vector<4x512xf32>
    %13 = arith.subf %3, %12 : vector<4x512xf32>
    %14 = arith.mulf %13, %13 : vector<4x512xf32>
    %cst_9 = arith.constant dense<0.000000e+00> : vector<4xf32>
    %15 = vector.multi_reduction <add>, %14, %cst_9 [1] : vector<4x512xf32> to vector<4xf32>
    %16 = vector.shape_cast %15 : vector<4xf32> to vector<4x1xf32>
    %cst_10 = arith.constant 0.001953125 : f32
    %17 = vector.broadcast %cst_10 : f32 to vector<4x1xf32>
    %18 = arith.mulf %16, %17 : vector<4x1xf32>
    %cst_11 = arith.constant 9.99999974E-6 : f32
    %19 = vector.broadcast %cst_11 : f32 to vector<4x1xf32>
    %20 = arith.addf %18, %19 : vector<4x1xf32>
    %21 = math.rsqrt %20 : vector<4x1xf32>
    %22 = arith.mulf %5, %21 : vector<4x1xf32>
    %23 = vector.broadcast %22 : vector<4x1xf32> to vector<4x512xf32>
    %24 = arith.mulf %13, %23 : vector<4x512xf32>
    %25 = vector.broadcast %7 : vector<4x1xf32> to vector<4x512xf32>
    %26 = arith.addf %24, %25 : vector<4x512xf32>
    %cst_12 = arith.constant 0.000000e+00 : f32
    %27 = vector.broadcast %cst_12 : f32 to vector<4x512xf32>
    %28 = arith.maximumf %26, %27 : vector<4x512xf32>
    %c0_13 = arith.constant 0 : index
    %c0_14 = arith.constant 0 : index
    %c0_15 = arith.constant 0 : index
    %29 = vector.load %arg5[%c0_13, %c0_14, %c0_15] : memref<1x2x4xf32, #tpu.memory_space<vmem>>, vector<1x2x4xf32>
    %30 = vector.shape_cast %29 : vector<1x2x4xf32> to vector<2x4xf32>
    %31 = vector.extract_strided_slice %28 {offsets = [0, 0], sizes = [1, 512], strides = [1, 1]} : vector<4x512xf32> to vector<1x512xf32>
    %32 = vector.extract_strided_slice %30 {offsets = [0, 0], sizes = [2, 1], strides = [1, 1]} : vector<2x4xf32> to vector<2x1xf32>
    %33 = vector.broadcast %31 : vector<1x512xf32> to vector<2x512xf32>
    %34 = vector.broadcast %32 : vector<2x1xf32> to vector<2x512xf32>
    %35 = arith.mulf %33, %34 : vector<2x512xf32>
    %36 = vector.extract_strided_slice %28 {offsets = [1, 0], sizes = [1, 512], strides = [1, 1]} : vector<4x512xf32> to vector<1x512xf32>
    %37 = vector.extract_strided_slice %30 {offsets = [0, 1], sizes = [2, 1], strides = [1, 1]} : vector<2x4xf32> to vector<2x1xf32>
    %38 = vector.broadcast %36 : vector<1x512xf32> to vector<2x512xf32>
    %39 = vector.broadcast %37 : vector<2x1xf32> to vector<2x512xf32>
    %40 = arith.mulf %38, %39 : vector<2x512xf32>
    %41 = arith.addf %35, %40 : vector<2x512xf32>
    %42 = vector.extract_strided_slice %28 {offsets = [2, 0], sizes = [1, 512], strides = [1, 1]} : vector<4x512xf32> to vector<1x512xf32>
    %43 = vector.extract_strided_slice %30 {offsets = [0, 2], sizes = [2, 1], strides = [1, 1]} : vector<2x4xf32> to vector<2x1xf32>
    %44 = vector.broadcast %42 : vector<1x512xf32> to vector<2x512xf32>
    %45 = vector.broadcast %43 : vector<2x1xf32> to vector<2x512xf32>
    %46 = arith.mulf %44, %45 : vector<2x512xf32>
    %47 = arith.addf %41, %46 : vector<2x512xf32>
    %48 = vector.extract_strided_slice %28 {offsets = [3, 0], sizes = [1, 512], strides = [1, 1]} : vector<4x512xf32> to vector<1x512xf32>
    %49 = vector.extract_strided_slice %30 {offsets = [0, 3], sizes = [2, 1], strides = [1, 1]} : vector<2x4xf32> to vector<2x1xf32>
    %50 = vector.broadcast %48 : vector<1x512xf32> to vector<2x512xf32>
    %51 = vector.broadcast %49 : vector<2x1xf32> to vector<2x512xf32>
    %52 = arith.mulf %50, %51 : vector<2x512xf32>
    %53 = arith.addf %47, %52 : vector<2x512xf32>
    %c0_16 = arith.constant 0 : index
    %c0_17 = arith.constant 0 : index
    %c0_18 = arith.constant 0 : index
    %54 = vector.load %arg6[%c0_16, %c0_17, %c0_18] : memref<1x2x1xf32, #tpu.memory_space<vmem>>, vector<1x2x1xf32>
    %55 = vector.shape_cast %54 : vector<1x2x1xf32> to vector<2x1xf32>
    %56 = vector.broadcast %55 : vector<2x1xf32> to vector<2x512xf32>
    %57 = arith.addf %53, %56 : vector<2x512xf32>
    %c0_19 = arith.constant 0 : index
    %c0_20 = arith.constant 0 : index
    %c0_21 = arith.constant 0 : index
    %58 = vector.load %arg7[%c0_19, %c0_20, %c0_21] : memref<1x2x1xf32, #tpu.memory_space<vmem>>, vector<1x2x1xf32>
    %59 = vector.shape_cast %58 : vector<1x2x1xf32> to vector<2x1xf32>
    %c0_22 = arith.constant 0 : index
    %c0_23 = arith.constant 0 : index
    %c0_24 = arith.constant 0 : index
    %60 = vector.load %arg8[%c0_22, %c0_23, %c0_24] : memref<1x2x1xf32, #tpu.memory_space<vmem>>, vector<1x2x1xf32>
    %61 = vector.shape_cast %60 : vector<1x2x1xf32> to vector<2x1xf32>
    %cst_25 = arith.constant dense<0.000000e+00> : vector<2xf32>
    %62 = vector.multi_reduction <add>, %57, %cst_25 [1] : vector<2x512xf32> to vector<2xf32>
    %63 = vector.shape_cast %62 : vector<2xf32> to vector<2x1xf32>
    %cst_26 = arith.constant 0.001953125 : f32
    %64 = vector.broadcast %cst_26 : f32 to vector<2x1xf32>
    %65 = arith.mulf %63, %64 : vector<2x1xf32>
    %66 = vector.broadcast %65 : vector<2x1xf32> to vector<2x512xf32>
    %67 = arith.subf %57, %66 : vector<2x512xf32>
    %68 = arith.mulf %67, %67 : vector<2x512xf32>
    %cst_27 = arith.constant dense<0.000000e+00> : vector<2xf32>
    %69 = vector.multi_reduction <add>, %68, %cst_27 [1] : vector<2x512xf32> to vector<2xf32>
    %70 = vector.shape_cast %69 : vector<2xf32> to vector<2x1xf32>
    %cst_28 = arith.constant 0.001953125 : f32
    %71 = vector.broadcast %cst_28 : f32 to vector<2x1xf32>
    %72 = arith.mulf %70, %71 : vector<2x1xf32>
    %cst_29 = arith.constant 9.99999974E-6 : f32
    %73 = vector.broadcast %cst_29 : f32 to vector<2x1xf32>
    %74 = arith.addf %72, %73 : vector<2x1xf32>
    %75 = math.rsqrt %74 : vector<2x1xf32>
    %76 = arith.mulf %59, %75 : vector<2x1xf32>
    %77 = vector.broadcast %76 : vector<2x1xf32> to vector<2x512xf32>
    %78 = arith.mulf %67, %77 : vector<2x512xf32>
    %79 = vector.broadcast %61 : vector<2x1xf32> to vector<2x512xf32>
    %80 = arith.addf %78, %79 : vector<2x512xf32>
    %cst_30 = arith.constant 0.000000e+00 : f32
    %81 = vector.broadcast %cst_30 : f32 to vector<2x512xf32>
    %82 = arith.maximumf %80, %81 : vector<2x512xf32>
    %cst_31 = arith.constant 0.000000e+00 : f32
    %83 = vector.broadcast %cst_31 : f32 to vector<2x17xf32>
    %84 = tpu.concatenate %83, %82, %83 in 1 : vector<2x17xf32>, vector<2x512xf32>, vector<2x17xf32> -> vector<2x546xf32>
    %85 = vector.extract_strided_slice %84 {offsets = [0, 0], sizes = [2, 512], strides = [1, 1]} : vector<2x546xf32> to vector<2x512xf32>
    %c0_32 = arith.constant 0 : index
    %c0_33 = arith.constant 0 : index
    %86 = vector.load %arg1[%c0_32, %c0_33] : memref<9x512xf32, #tpu.memory_space<vmem>>, vector<1x512xf32>
    %87 = vector.broadcast %86 : vector<1x512xf32> to vector<2x512xf32>
    %88 = arith.mulf %85, %87 : vector<2x512xf32>
    %c0_34 = arith.constant 0 : index
    %c0_35 = arith.constant 0 : index
    %c0_36 = arith.constant 0 : index
    %c0_37 = arith.constant 0 : index
    %89 = vector.load %arg9[%c0_34, %c0_35, %c0_36, %c0_37] : memref<1x9x2x2xf32, #tpu.memory_space<vmem>>, vector<1x1x2x2xf32>
    %90 = vector.shape_cast %89 : vector<1x1x2x2xf32> to vector<2x2xf32>
    %91 = vector.extract_strided_slice %88 {offsets = [0, 0], sizes = [1, 512], strides = [1, 1]} : vector<2x512xf32> to vector<1x512xf32>
    %92 = vector.extract_strided_slice %90 {offsets = [0, 0], sizes = [2, 1], strides = [1, 1]} : vector<2x2xf32> to vector<2x1xf32>
    %93 = vector.broadcast %91 : vector<1x512xf32> to vector<2x512xf32>
    %94 = vector.broadcast %92 : vector<2x1xf32> to vector<2x512xf32>
    %95 = arith.mulf %93, %94 : vector<2x512xf32>
    %96 = vector.extract_strided_slice %88 {offsets = [1, 0], sizes = [1, 512], strides = [1, 1]} : vector<2x512xf32> to vector<1x512xf32>
    %97 = vector.extract_strided_slice %90 {offsets = [0, 1], sizes = [2, 1], strides = [1, 1]} : vector<2x2xf32> to vector<2x1xf32>
    %98 = vector.broadcast %96 : vector<1x512xf32> to vector<2x512xf32>
    %99 = vector.broadcast %97 : vector<2x1xf32> to vector<2x512xf32>
    %100 = arith.mulf %98, %99 : vector<2x512xf32>
    %101 = arith.addf %95, %100 : vector<2x512xf32>
    %102 = vector.extract_strided_slice %84 {offsets = [0, 1], sizes = [2, 512], strides = [1, 1]} : vector<2x546xf32> to vector<2x512xf32>
    %c1 = arith.constant 1 : index
    %c0_38 = arith.constant 0 : index
    %103 = vector.load %arg1[%c1, %c0_38] : memref<9x512xf32, #tpu.memory_space<vmem>>, vector<1x512xf32>
    %104 = vector.broadcast %103 : vector<1x512xf32> to vector<2x512xf32>
    %105 = arith.mulf %102, %104 : vector<2x512xf32>
    %c0_39 = arith.constant 0 : index
    %c1_40 = arith.constant 1 : index
    %c0_41 = arith.constant 0 : index
    %c0_42 = arith.constant 0 : index
    %106 = vector.load %arg9[%c0_39, %c1_40, %c0_41, %c0_42] : memref<1x9x2x2xf32, #tpu.memory_space<vmem>>, vector<1x1x2x2xf32>
    %107 = vector.shape_cast %106 : vector<1x1x2x2xf32> to vector<2x2xf32>
    %108 = vector.extract_strided_slice %105 {offsets = [0, 0], sizes = [1, 512], strides = [1, 1]} : vector<2x512xf32> to vector<1x512xf32>
    %109 = vector.extract_strided_slice %107 {offsets = [0, 0], sizes = [2, 1], strides = [1, 1]} : vector<2x2xf32> to vector<2x1xf32>
    %110 = vector.broadcast %108 : vector<1x512xf32> to vector<2x512xf32>
    %111 = vector.broadcast %109 : vector<2x1xf32> to vector<2x512xf32>
    %112 = arith.mulf %110, %111 : vector<2x512xf32>
    %113 = arith.addf %101, %112 : vector<2x512xf32>
    %114 = vector.extract_strided_slice %105 {offsets = [1, 0], sizes = [1, 512], strides = [1, 1]} : vector<2x512xf32> to vector<1x512xf32>
    %115 = vector.extract_strided_slice %107 {offsets = [0, 1], sizes = [2, 1], strides = [1, 1]} : vector<2x2xf32> to vector<2x1xf32>
    %116 = vector.broadcast %114 : vector<1x512xf32> to vector<2x512xf32>
    %117 = vector.broadcast %115 : vector<2x1xf32> to vector<2x512xf32>
    %118 = arith.mulf %116, %117 : vector<2x512xf32>
    %119 = arith.addf %113, %118 : vector<2x512xf32>
    %120 = vector.extract_strided_slice %84 {offsets = [0, 2], sizes = [2, 512], strides = [1, 1]} : vector<2x546xf32> to vector<2x512xf32>
    %c2 = arith.constant 2 : index
    %c0_43 = arith.constant 0 : index
    %121 = vector.load %arg1[%c2, %c0_43] : memref<9x512xf32, #tpu.memory_space<vmem>>, vector<1x512xf32>
    %122 = vector.broadcast %121 : vector<1x512xf32> to vector<2x512xf32>
    %123 = arith.mulf %120, %122 : vector<2x512xf32>
    %c0_44 = arith.constant 0 : index
    %c2_45 = arith.constant 2 : index
    %c0_46 = arith.constant 0 : index
    %c0_47 = arith.constant 0 : index
    %124 = vector.load %arg9[%c0_44, %c2_45, %c0_46, %c0_47] : memref<1x9x2x2xf32, #tpu.memory_space<vmem>>, vector<1x1x2x2xf32>
    %125 = vector.shape_cast %124 : vector<1x1x2x2xf32> to vector<2x2xf32>
    %126 = vector.extract_strided_slice %123 {offsets = [0, 0], sizes = [1, 512], strides = [1, 1]} : vector<2x512xf32> to vector<1x512xf32>
    %127 = vector.extract_strided_slice %125 {offsets = [0, 0], sizes = [2, 1], strides = [1, 1]} : vector<2x2xf32> to vector<2x1xf32>
    %128 = vector.broadcast %126 : vector<1x512xf32> to vector<2x512xf32>
    %129 = vector.broadcast %127 : vector<2x1xf32> to vector<2x512xf32>
    %130 = arith.mulf %128, %129 : vector<2x512xf32>
    %131 = arith.addf %119, %130 : vector<2x512xf32>
    %132 = vector.extract_strided_slice %123 {offsets = [1, 0], sizes = [1, 512], strides = [1, 1]} : vector<2x512xf32> to vector<1x512xf32>
    %133 = vector.extract_strided_slice %125 {offsets = [0, 1], sizes = [2, 1], strides = [1, 1]} : vector<2x2xf32> to vector<2x1xf32>
    %134 = vector.broadcast %132 : vector<1x512xf32> to vector<2x512xf32>
    %135 = vector.broadcast %133 : vector<2x1xf32> to vector<2x512xf32>
    %136 = arith.mulf %134, %135 : vector<2x512xf32>
    %137 = arith.addf %131, %136 : vector<2x512xf32>
    %138 = vector.extract_strided_slice %84 {offsets = [0, 16], sizes = [2, 512], strides = [1, 1]} : vector<2x546xf32> to vector<2x512xf32>
    %c3 = arith.constant 3 : index
    %c0_48 = arith.constant 0 : index
    %139 = vector.load %arg1[%c3, %c0_48] : memref<9x512xf32, #tpu.memory_space<vmem>>, vector<1x512xf32>
    %140 = vector.broadcast %139 : vector<1x512xf32> to vector<2x512xf32>
    %141 = arith.mulf %138, %140 : vector<2x512xf32>
    %c0_49 = arith.constant 0 : index
    %c3_50 = arith.constant 3 : index
    %c0_51 = arith.constant 0 : index
    %c0_52 = arith.constant 0 : index
    %142 = vector.load %arg9[%c0_49, %c3_50, %c0_51, %c0_52] : memref<1x9x2x2xf32, #tpu.memory_space<vmem>>, vector<1x1x2x2xf32>
    %143 = vector.shape_cast %142 : vector<1x1x2x2xf32> to vector<2x2xf32>
    %144 = vector.extract_strided_slice %141 {offsets = [0, 0], sizes = [1, 512], strides = [1, 1]} : vector<2x512xf32> to vector<1x512xf32>
    %145 = vector.extract_strided_slice %143 {offsets = [0, 0], sizes = [2, 1], strides = [1, 1]} : vector<2x2xf32> to vector<2x1xf32>
    %146 = vector.broadcast %144 : vector<1x512xf32> to vector<2x512xf32>
    %147 = vector.broadcast %145 : vector<2x1xf32> to vector<2x512xf32>
    %148 = arith.mulf %146, %147 : vector<2x512xf32>
    %149 = arith.addf %137, %148 : vector<2x512xf32>
    %150 = vector.extract_strided_slice %141 {offsets = [1, 0], sizes = [1, 512], strides = [1, 1]} : vector<2x512xf32> to vector<1x512xf32>
    %151 = vector.extract_strided_slice %143 {offsets = [0, 1], sizes = [2, 1], strides = [1, 1]} : vector<2x2xf32> to vector<2x1xf32>
    %152 = vector.broadcast %150 : vector<1x512xf32> to vector<2x512xf32>
    %153 = vector.broadcast %151 : vector<2x1xf32> to vector<2x512xf32>
    %154 = arith.mulf %152, %153 : vector<2x512xf32>
    %155 = arith.addf %149, %154 : vector<2x512xf32>
    %156 = vector.extract_strided_slice %84 {offsets = [0, 17], sizes = [2, 512], strides = [1, 1]} : vector<2x546xf32> to vector<2x512xf32>
    %c0_53 = arith.constant 0 : index
    %c4 = arith.constant 4 : index
    %c0_54 = arith.constant 0 : index
    %c0_55 = arith.constant 0 : index
    %157 = vector.load %arg9[%c0_53, %c4, %c0_54, %c0_55] : memref<1x9x2x2xf32, #tpu.memory_space<vmem>>, vector<1x1x2x2xf32>
    %158 = vector.shape_cast %157 : vector<1x1x2x2xf32> to vector<2x2xf32>
    %159 = vector.extract_strided_slice %156 {offsets = [0, 0], sizes = [1, 512], strides = [1, 1]} : vector<2x512xf32> to vector<1x512xf32>
    %160 = vector.extract_strided_slice %158 {offsets = [0, 0], sizes = [2, 1], strides = [1, 1]} : vector<2x2xf32> to vector<2x1xf32>
    %161 = vector.broadcast %159 : vector<1x512xf32> to vector<2x512xf32>
    %162 = vector.broadcast %160 : vector<2x1xf32> to vector<2x512xf32>
    %163 = arith.mulf %161, %162 : vector<2x512xf32>
    %164 = arith.addf %155, %163 : vector<2x512xf32>
    %165 = vector.extract_strided_slice %156 {offsets = [1, 0], sizes = [1, 512], strides = [1, 1]} : vector<2x512xf32> to vector<1x512xf32>
    %166 = vector.extract_strided_slice %158 {offsets = [0, 1], sizes = [2, 1], strides = [1, 1]} : vector<2x2xf32> to vector<2x1xf32>
    %167 = vector.broadcast %165 : vector<1x512xf32> to vector<2x512xf32>
    %168 = vector.broadcast %166 : vector<2x1xf32> to vector<2x512xf32>
    %169 = arith.mulf %167, %168 : vector<2x512xf32>
    %170 = arith.addf %164, %169 : vector<2x512xf32>
    %171 = vector.extract_strided_slice %84 {offsets = [0, 18], sizes = [2, 512], strides = [1, 1]} : vector<2x546xf32> to vector<2x512xf32>
    %c5 = arith.constant 5 : index
    %c0_56 = arith.constant 0 : index
    %172 = vector.load %arg1[%c5, %c0_56] : memref<9x512xf32, #tpu.memory_space<vmem>>, vector<1x512xf32>
    %173 = vector.broadcast %172 : vector<1x512xf32> to vector<2x512xf32>
    %174 = arith.mulf %171, %173 : vector<2x512xf32>
    %c0_57 = arith.constant 0 : index
    %c5_58 = arith.constant 5 : index
    %c0_59 = arith.constant 0 : index
    %c0_60 = arith.constant 0 : index
    %175 = vector.load %arg9[%c0_57, %c5_58, %c0_59, %c0_60] : memref<1x9x2x2xf32, #tpu.memory_space<vmem>>, vector<1x1x2x2xf32>
    %176 = vector.shape_cast %175 : vector<1x1x2x2xf32> to vector<2x2xf32>
    %177 = vector.extract_strided_slice %174 {offsets = [0, 0], sizes = [1, 512], strides = [1, 1]} : vector<2x512xf32> to vector<1x512xf32>
    %178 = vector.extract_strided_slice %176 {offsets = [0, 0], sizes = [2, 1], strides = [1, 1]} : vector<2x2xf32> to vector<2x1xf32>
    %179 = vector.broadcast %177 : vector<1x512xf32> to vector<2x512xf32>
    %180 = vector.broadcast %178 : vector<2x1xf32> to vector<2x512xf32>
    %181 = arith.mulf %179, %180 : vector<2x512xf32>
    %182 = arith.addf %170, %181 : vector<2x512xf32>
    %183 = vector.extract_strided_slice %174 {offsets = [1, 0], sizes = [1, 512], strides = [1, 1]} : vector<2x512xf32> to vector<1x512xf32>
    %184 = vector.extract_strided_slice %176 {offsets = [0, 1], sizes = [2, 1], strides = [1, 1]} : vector<2x2xf32> to vector<2x1xf32>
    %185 = vector.broadcast %183 : vector<1x512xf32> to vector<2x512xf32>
    %186 = vector.broadcast %184 : vector<2x1xf32> to vector<2x512xf32>
    %187 = arith.mulf %185, %186 : vector<2x512xf32>
    %188 = arith.addf %182, %187 : vector<2x512xf32>
    %189 = vector.extract_strided_slice %84 {offsets = [0, 32], sizes = [2, 512], strides = [1, 1]} : vector<2x546xf32> to vector<2x512xf32>
    %c6 = arith.constant 6 : index
    %c0_61 = arith.constant 0 : index
    %190 = vector.load %arg1[%c6, %c0_61] : memref<9x512xf32, #tpu.memory_space<vmem>>, vector<1x512xf32>
    %191 = vector.broadcast %190 : vector<1x512xf32> to vector<2x512xf32>
    %192 = arith.mulf %189, %191 : vector<2x512xf32>
    %c0_62 = arith.constant 0 : index
    %c6_63 = arith.constant 6 : index
    %c0_64 = arith.constant 0 : index
    %c0_65 = arith.constant 0 : index
    %193 = vector.load %arg9[%c0_62, %c6_63, %c0_64, %c0_65] : memref<1x9x2x2xf32, #tpu.memory_space<vmem>>, vector<1x1x2x2xf32>
    %194 = vector.shape_cast %193 : vector<1x1x2x2xf32> to vector<2x2xf32>
    %195 = vector.extract_strided_slice %192 {offsets = [0, 0], sizes = [1, 512], strides = [1, 1]} : vector<2x512xf32> to vector<1x512xf32>
    %196 = vector.extract_strided_slice %194 {offsets = [0, 0], sizes = [2, 1], strides = [1, 1]} : vector<2x2xf32> to vector<2x1xf32>
    %197 = vector.broadcast %195 : vector<1x512xf32> to vector<2x512xf32>
    %198 = vector.broadcast %196 : vector<2x1xf32> to vector<2x512xf32>
    %199 = arith.mulf %197, %198 : vector<2x512xf32>
    %200 = arith.addf %188, %199 : vector<2x512xf32>
    %201 = vector.extract_strided_slice %192 {offsets = [1, 0], sizes = [1, 512], strides = [1, 1]} : vector<2x512xf32> to vector<1x512xf32>
    %202 = vector.extract_strided_slice %194 {offsets = [0, 1], sizes = [2, 1], strides = [1, 1]} : vector<2x2xf32> to vector<2x1xf32>
    %203 = vector.broadcast %201 : vector<1x512xf32> to vector<2x512xf32>
    %204 = vector.broadcast %202 : vector<2x1xf32> to vector<2x512xf32>
    %205 = arith.mulf %203, %204 : vector<2x512xf32>
    %206 = arith.addf %200, %205 : vector<2x512xf32>
    %207 = vector.extract_strided_slice %84 {offsets = [0, 33], sizes = [2, 512], strides = [1, 1]} : vector<2x546xf32> to vector<2x512xf32>
    %c7 = arith.constant 7 : index
    %c0_66 = arith.constant 0 : index
    %208 = vector.load %arg1[%c7, %c0_66] : memref<9x512xf32, #tpu.memory_space<vmem>>, vector<1x512xf32>
    %209 = vector.broadcast %208 : vector<1x512xf32> to vector<2x512xf32>
    %210 = arith.mulf %207, %209 : vector<2x512xf32>
    %c0_67 = arith.constant 0 : index
    %c7_68 = arith.constant 7 : index
    %c0_69 = arith.constant 0 : index
    %c0_70 = arith.constant 0 : index
    %211 = vector.load %arg9[%c0_67, %c7_68, %c0_69, %c0_70] : memref<1x9x2x2xf32, #tpu.memory_space<vmem>>, vector<1x1x2x2xf32>
    %212 = vector.shape_cast %211 : vector<1x1x2x2xf32> to vector<2x2xf32>
    %213 = vector.extract_strided_slice %210 {offsets = [0, 0], sizes = [1, 512], strides = [1, 1]} : vector<2x512xf32> to vector<1x512xf32>
    %214 = vector.extract_strided_slice %212 {offsets = [0, 0], sizes = [2, 1], strides = [1, 1]} : vector<2x2xf32> to vector<2x1xf32>
    %215 = vector.broadcast %213 : vector<1x512xf32> to vector<2x512xf32>
    %216 = vector.broadcast %214 : vector<2x1xf32> to vector<2x512xf32>
    %217 = arith.mulf %215, %216 : vector<2x512xf32>
    %218 = arith.addf %206, %217 : vector<2x512xf32>
    %219 = vector.extract_strided_slice %210 {offsets = [1, 0], sizes = [1, 512], strides = [1, 1]} : vector<2x512xf32> to vector<1x512xf32>
    %220 = vector.extract_strided_slice %212 {offsets = [0, 1], sizes = [2, 1], strides = [1, 1]} : vector<2x2xf32> to vector<2x1xf32>
    %221 = vector.broadcast %219 : vector<1x512xf32> to vector<2x512xf32>
    %222 = vector.broadcast %220 : vector<2x1xf32> to vector<2x512xf32>
    %223 = arith.mulf %221, %222 : vector<2x512xf32>
    %224 = arith.addf %218, %223 : vector<2x512xf32>
    %225 = vector.extract_strided_slice %84 {offsets = [0, 34], sizes = [2, 512], strides = [1, 1]} : vector<2x546xf32> to vector<2x512xf32>
    %c8 = arith.constant 8 : index
    %c0_71 = arith.constant 0 : index
    %226 = vector.load %arg1[%c8, %c0_71] : memref<9x512xf32, #tpu.memory_space<vmem>>, vector<1x512xf32>
    %227 = vector.broadcast %226 : vector<1x512xf32> to vector<2x512xf32>
    %228 = arith.mulf %225, %227 : vector<2x512xf32>
    %c0_72 = arith.constant 0 : index
    %c8_73 = arith.constant 8 : index
    %c0_74 = arith.constant 0 : index
    %c0_75 = arith.constant 0 : index
    %229 = vector.load %arg9[%c0_72, %c8_73, %c0_74, %c0_75] : memref<1x9x2x2xf32, #tpu.memory_space<vmem>>, vector<1x1x2x2xf32>
    %230 = vector.shape_cast %229 : vector<1x1x2x2xf32> to vector<2x2xf32>
    %231 = vector.extract_strided_slice %228 {offsets = [0, 0], sizes = [1, 512], strides = [1, 1]} : vector<2x512xf32> to vector<1x512xf32>
    %232 = vector.extract_strided_slice %230 {offsets = [0, 0], sizes = [2, 1], strides = [1, 1]} : vector<2x2xf32> to vector<2x1xf32>
    %233 = vector.broadcast %231 : vector<1x512xf32> to vector<2x512xf32>
    %234 = vector.broadcast %232 : vector<2x1xf32> to vector<2x512xf32>
    %235 = arith.mulf %233, %234 : vector<2x512xf32>
    %236 = arith.addf %224, %235 : vector<2x512xf32>
    %237 = vector.extract_strided_slice %228 {offsets = [1, 0], sizes = [1, 512], strides = [1, 1]} : vector<2x512xf32> to vector<1x512xf32>
    %238 = vector.extract_strided_slice %230 {offsets = [0, 1], sizes = [2, 1], strides = [1, 1]} : vector<2x2xf32> to vector<2x1xf32>
    %239 = vector.broadcast %237 : vector<1x512xf32> to vector<2x512xf32>
    %240 = vector.broadcast %238 : vector<2x1xf32> to vector<2x512xf32>
    %241 = arith.mulf %239, %240 : vector<2x512xf32>
    %242 = arith.addf %236, %241 : vector<2x512xf32>
    %c0_76 = arith.constant 0 : index
    %c0_77 = arith.constant 0 : index
    %c0_78 = arith.constant 0 : index
    %243 = vector.load %arg10[%c0_76, %c0_77, %c0_78] : memref<1x2x1xf32, #tpu.memory_space<vmem>>, vector<1x2x1xf32>
    %244 = vector.shape_cast %243 : vector<1x2x1xf32> to vector<2x1xf32>
    %245 = vector.broadcast %244 : vector<2x1xf32> to vector<2x512xf32>
    %246 = arith.addf %242, %245 : vector<2x512xf32>
    %c0_79 = arith.constant 0 : index
    %c0_80 = arith.constant 0 : index
    %c0_81 = arith.constant 0 : index
    %247 = vector.load %arg11[%c0_79, %c0_80, %c0_81] : memref<1x2x1xf32, #tpu.memory_space<vmem>>, vector<1x2x1xf32>
    %248 = vector.shape_cast %247 : vector<1x2x1xf32> to vector<2x1xf32>
    %c0_82 = arith.constant 0 : index
    %c0_83 = arith.constant 0 : index
    %c0_84 = arith.constant 0 : index
    %249 = vector.load %arg12[%c0_82, %c0_83, %c0_84] : memref<1x2x1xf32, #tpu.memory_space<vmem>>, vector<1x2x1xf32>
    %250 = vector.shape_cast %249 : vector<1x2x1xf32> to vector<2x1xf32>
    %cst_85 = arith.constant dense<0.000000e+00> : vector<2xf32>
    %251 = vector.multi_reduction <add>, %246, %cst_85 [1] : vector<2x512xf32> to vector<2xf32>
    %252 = vector.shape_cast %251 : vector<2xf32> to vector<2x1xf32>
    %cst_86 = arith.constant 0.001953125 : f32
    %253 = vector.broadcast %cst_86 : f32 to vector<2x1xf32>
    %254 = arith.mulf %252, %253 : vector<2x1xf32>
    %255 = vector.broadcast %254 : vector<2x1xf32> to vector<2x512xf32>
    %256 = arith.subf %246, %255 : vector<2x512xf32>
    %257 = arith.mulf %256, %256 : vector<2x512xf32>
    %cst_87 = arith.constant dense<0.000000e+00> : vector<2xf32>
    %258 = vector.multi_reduction <add>, %257, %cst_87 [1] : vector<2x512xf32> to vector<2xf32>
    %259 = vector.shape_cast %258 : vector<2xf32> to vector<2x1xf32>
    %cst_88 = arith.constant 0.001953125 : f32
    %260 = vector.broadcast %cst_88 : f32 to vector<2x1xf32>
    %261 = arith.mulf %259, %260 : vector<2x1xf32>
    %cst_89 = arith.constant 9.99999974E-6 : f32
    %262 = vector.broadcast %cst_89 : f32 to vector<2x1xf32>
    %263 = arith.addf %261, %262 : vector<2x1xf32>
    %264 = math.rsqrt %263 : vector<2x1xf32>
    %265 = arith.mulf %248, %264 : vector<2x1xf32>
    %266 = vector.broadcast %265 : vector<2x1xf32> to vector<2x512xf32>
    %267 = arith.mulf %256, %266 : vector<2x512xf32>
    %268 = vector.broadcast %250 : vector<2x1xf32> to vector<2x512xf32>
    %269 = arith.addf %267, %268 : vector<2x512xf32>
    %cst_90 = arith.constant 0.000000e+00 : f32
    %270 = vector.broadcast %cst_90 : f32 to vector<2x512xf32>
    %271 = arith.maximumf %269, %270 : vector<2x512xf32>
    %c0_91 = arith.constant 0 : index
    %c0_92 = arith.constant 0 : index
    %c0_93 = arith.constant 0 : index
    %272 = vector.load %arg13[%c0_91, %c0_92, %c0_93] : memref<1x4x2xf32, #tpu.memory_space<vmem>>, vector<1x4x2xf32>
    %273 = vector.shape_cast %272 : vector<1x4x2xf32> to vector<4x2xf32>
    %274 = vector.extract_strided_slice %271 {offsets = [0, 0], sizes = [1, 512], strides = [1, 1]} : vector<2x512xf32> to vector<1x512xf32>
    %275 = vector.extract_strided_slice %273 {offsets = [0, 0], sizes = [4, 1], strides = [1, 1]} : vector<4x2xf32> to vector<4x1xf32>
    %276 = vector.broadcast %274 : vector<1x512xf32> to vector<4x512xf32>
    %277 = vector.broadcast %275 : vector<4x1xf32> to vector<4x512xf32>
    %278 = arith.mulf %276, %277 : vector<4x512xf32>
    %279 = vector.extract_strided_slice %271 {offsets = [1, 0], sizes = [1, 512], strides = [1, 1]} : vector<2x512xf32> to vector<1x512xf32>
    %280 = vector.extract_strided_slice %273 {offsets = [0, 1], sizes = [4, 1], strides = [1, 1]} : vector<4x2xf32> to vector<4x1xf32>
    %281 = vector.broadcast %279 : vector<1x512xf32> to vector<4x512xf32>
    %282 = vector.broadcast %280 : vector<4x1xf32> to vector<4x512xf32>
    %283 = arith.mulf %281, %282 : vector<4x512xf32>
    %284 = arith.addf %278, %283 : vector<4x512xf32>
    %c0_94 = arith.constant 0 : index
    %c0_95 = arith.constant 0 : index
    %c0_96 = arith.constant 0 : index
    %285 = vector.load %arg14[%c0_94, %c0_95, %c0_96] : memref<1x4x1xf32, #tpu.memory_space<vmem>>, vector<1x4x1xf32>
    %286 = vector.shape_cast %285 : vector<1x4x1xf32> to vector<4x1xf32>
    %287 = vector.broadcast %286 : vector<4x1xf32> to vector<4x512xf32>
    %288 = arith.addf %284, %287 : vector<4x512xf32>
    %289 = arith.addf %288, %3 : vector<4x512xf32>
    %c0_97 = arith.constant 0 : index
    %c0_98 = arith.constant 0 : index
    %290 = vector.load %arg16[%c0_97, %c0_98] : memref<4x512xf32, #tpu.memory_space<vmem>>, vector<4x512xf32>
    tpu.vector_store %arg16[%c0_97, %c0_98], %289 {strides = array<i32>} : memref<4x512xf32, #tpu.memory_space<vmem>>, vector<4x512xf32>,
    %c1_i32 = arith.constant 1 : i32
    %291 = arith.cmpi eq, %arg0, %c1_i32 : i32
    %292 = arith.extui %291 : i1 to i32
    %c0_i32_99 = arith.constant 0 : i32
    %293 = arith.cmpi ne, %292, %c0_i32_99 : i32
    scf.if %293 {
      %c0_100 = arith.constant 0 : index
      %c0_101 = arith.constant 0 : index
      %294 = vector.load %arg15[%c0_100, %c0_101] : memref<4x512xf32, #tpu.memory_space<vmem>>, vector<4x512xf32>
      tpu.vector_store %arg15[%c0_100, %c0_101], %289 {strides = array<i32>} : memref<4x512xf32, #tpu.memory_space<vmem>>, vector<4x512xf32>,
    } else {
    }
    return
  }
  func.func @transform_0(%arg0: i32) -> (i32, i32) {
    %c0_i32 = arith.constant 0 : i32
    %c0_i32_0 = arith.constant 0 : i32
    %c0_i32_1 = arith.constant 0 : i32
    return %c0_i32, %c0_i32_0 : i32, i32
  }
  func.func @transform_1(%arg0: i32) -> (i32, i32) {
    %c0_i32 = arith.constant 0 : i32
    %c0_i32_0 = arith.constant 0 : i32
    %c0_i32_1 = arith.constant 0 : i32
    return %c0_i32, %c0_i32_0 : i32, i32
  }
  func.func @transform_2(%arg0: i32) -> (i32, i32, i32) {
    %c0_i32 = arith.constant 0 : i32
    %c0_i32_0 = arith.constant 0 : i32
    %c0_i32_1 = arith.constant 0 : i32
    return %arg0, %c0_i32, %c0_i32_0 : i32, i32, i32
  }
  func.func @transform_3(%arg0: i32) -> (i32, i32, i32) {
    %c0_i32 = arith.constant 0 : i32
    %c0_i32_0 = arith.constant 0 : i32
    %c0_i32_1 = arith.constant 0 : i32
    return %arg0, %c0_i32, %c0_i32_0 : i32, i32, i32
  }
  func.func @transform_4(%arg0: i32) -> (i32, i32, i32) {
    %c0_i32 = arith.constant 0 : i32
    %c0_i32_0 = arith.constant 0 : i32
    %c0_i32_1 = arith.constant 0 : i32
    return %arg0, %c0_i32, %c0_i32_0 : i32, i32, i32
  }
  func.func @transform_5(%arg0: i32) -> (i32, i32, i32) {
    %c0_i32 = arith.constant 0 : i32
    %c0_i32_0 = arith.constant 0 : i32
    %c0_i32_1 = arith.constant 0 : i32
    return %arg0, %c0_i32, %c0_i32_0 : i32, i32, i32
  }
  func.func @transform_6(%arg0: i32) -> (i32, i32, i32) {
    %c0_i32 = arith.constant 0 : i32
    %c0_i32_0 = arith.constant 0 : i32
    %c0_i32_1 = arith.constant 0 : i32
    return %arg0, %c0_i32, %c0_i32_0 : i32, i32, i32
  }
  func.func @transform_7(%arg0: i32) -> (i32, i32, i32) {
    %c0_i32 = arith.constant 0 : i32
    %c0_i32_0 = arith.constant 0 : i32
    %c0_i32_1 = arith.constant 0 : i32
    return %arg0, %c0_i32, %c0_i32_0 : i32, i32, i32
  }
  func.func @transform_8(%arg0: i32) -> (i32, i32, i32, i32) {
    %c0_i32 = arith.constant 0 : i32
    %c0_i32_0 = arith.constant 0 : i32
    %c0_i32_1 = arith.constant 0 : i32
    %c0_i32_2 = arith.constant 0 : i32
    return %arg0, %c0_i32, %c0_i32_0, %c0_i32_1 : i32, i32, i32, i32
  }
  func.func @transform_9(%arg0: i32) -> (i32, i32, i32) {
    %c0_i32 = arith.constant 0 : i32
    %c0_i32_0 = arith.constant 0 : i32
    %c0_i32_1 = arith.constant 0 : i32
    return %arg0, %c0_i32, %c0_i32_0 : i32, i32, i32
  }
  func.func @transform_10(%arg0: i32) -> (i32, i32, i32) {
    %c0_i32 = arith.constant 0 : i32
    %c0_i32_0 = arith.constant 0 : i32
    %c0_i32_1 = arith.constant 0 : i32
    return %arg0, %c0_i32, %c0_i32_0 : i32, i32, i32
  }
  func.func @transform_11(%arg0: i32) -> (i32, i32, i32) {
    %c0_i32 = arith.constant 0 : i32
    %c0_i32_0 = arith.constant 0 : i32
    %c0_i32_1 = arith.constant 0 : i32
    return %arg0, %c0_i32, %c0_i32_0 : i32, i32, i32
  }
  func.func @transform_12(%arg0: i32) -> (i32, i32, i32) {
    %c0_i32 = arith.constant 0 : i32
    %c0_i32_0 = arith.constant 0 : i32
    %c0_i32_1 = arith.constant 0 : i32
    return %arg0, %c0_i32, %c0_i32_0 : i32, i32, i32
  }
  func.func @transform_13(%arg0: i32) -> (i32, i32, i32) {
    %c0_i32 = arith.constant 0 : i32
    %c0_i32_0 = arith.constant 0 : i32
    %c0_i32_1 = arith.constant 0 : i32
    return %arg0, %c0_i32, %c0_i32_0 : i32, i32, i32
  }
  func.func @transform_14(%arg0: i32) -> (i32, i32) {
    %c0_i32 = arith.constant 0 : i32
    %c0_i32_0 = arith.constant 0 : i32
    %c0_i32_1 = arith.constant 0 : i32
    return %c0_i32, %c0_i32_0 : i32, i32
  }
}

</mosaic_0001>

<llo_original>
// kernel: tpu_custom_call.1
$region0: #{tpu_custom_call.1}
  #allocation0 [shape = 'u32[]', space=smem, size = 0x4, offset = 0x4, fixed_abs, tag = 'smem constant byte address 0x4 - core index']
  #allocation1 [shape = 'u32[144,128]{1,0:T(1,128)}', space=vmem, size = 0x12000, scoped, tag = 'internal scratch']
  #allocation2 [shape = 'f32[4,512]{1,0:T(4,128)}', space=vmem, size = 0x2000, scoped, tag = 'scratch operand']
  %s0 = inlined_call_operand.vmem [shape: f32[9,512], index: 0, kind: input, shape index: {}]
  %s1 = inlined_call_operand.vmem [shape: f32[4,512], index: 1, kind: input, shape index: {}]
  %s2 = inlined_call_operand.vmem [shape: f32[2,4,1], index: 2, kind: input, shape index: {}]
  %s3 = inlined_call_operand.vmem [shape: f32[2,4,1], index: 3, kind: input, shape index: {}]
  %s4 = inlined_call_operand.vmem [shape: f32[2,2,4], index: 4, kind: input, shape index: {}]
  %s5 = inlined_call_operand.vmem [shape: f32[2,2,1], index: 5, kind: input, shape index: {}]
  %s6 = inlined_call_operand.vmem [shape: f32[2,2,1], index: 6, kind: input, shape index: {}]
  %s7 = inlined_call_operand.vmem [shape: f32[2,2,1], index: 7, kind: input, shape index: {}]
  %s8 = inlined_call_operand.vmem [shape: f32[2,9,2,2], index: 8, kind: input, shape index: {}]
  %s9 = inlined_call_operand.vmem [shape: f32[2,2,1], index: 9, kind: input, shape index: {}]
  %s10 = inlined_call_operand.vmem [shape: f32[2,2,1], index: 10, kind: input, shape index: {}]
  %s11 = inlined_call_operand.vmem [shape: f32[2,2,1], index: 11, kind: input, shape index: {}]
  %s12 = inlined_call_operand.vmem [shape: f32[2,4,2], index: 12, kind: input, shape index: {}]
  %s13 = inlined_call_operand.vmem [shape: f32[2,4,1], index: 13, kind: input, shape index: {}]
  %s14 = inlined_call_operand.hbm [shape: f32[4,512], index: 14, kind: output, shape index: {}]
  %s15 = sld [smem:[#allocation0]]
  $region97: #{tpu_custom_call.1} parent=0
    _
  %s17 = ssub.s32 1, %s15
  %s18 = scalar_select 0, %s17, %s15
  $region1: #{tpu_custom_call.1} parent=0
    #allocation3 [shape = 'u8[8192]{0}', space=vmem, size = 0x2000, scoped, tag = 'output window, operand 0, single buffered']
    #allocation4 [shape = 's32[2]{0}', space=sflag, size = 0x8, scoped, tag = 'scoped memory for tpu_custom_call.1']
    %19 = vsyncpa [#allocation4], 0
    loop: start=0, step=1, limit=4
    $region2: #{tpu_custom_call.1} parent=1 // loop_pre_header
      _
    $region3: #{tpu_custom_call.1} parent=1 // loop_header
      %s21 = sphi 0, %s25
      %p22 = scmp.ge.s32.totalorder %s21, 4
      %s29 = sphi 0, %s29
      %s31 = sphi 0, %s29
      %s32 = sphi 0, %s31
      %s46 = sphi 0, %s32
      %s50 = sphi 0, %s50
      %s52 = sphi 0, %s50
      %s53 = sphi 0, %s52
      %s67 = sphi 0, %s53
      %s73 = sphi 0, %s75
      %s76 = sphi 0, %s73
      %s77 = sphi 0, %s76
      %s93 = sphi 0, %s77
      %s99 = sphi 0, %s101
      %s102 = sphi 0, %s99
      %s103 = sphi 0, %s102
      %s119 = sphi 0, %s103
      %s125 = sphi 0, %s127
      %s128 = sphi 0, %s125
      %s129 = sphi 0, %s128
      %s145 = sphi 0, %s129
      %s151 = sphi 0, %s153
      %s154 = sphi 0, %s151
      %s155 = sphi 0, %s154
      %s171 = sphi 0, %s155
      %s177 = sphi 0, %s179
      %s180 = sphi 0, %s177
      %s181 = sphi 0, %s180
      %s197 = sphi 0, %s181
      %s203 = sphi 0, %s205
      %s206 = sphi 0, %s203
      %s207 = sphi 0, %s206
      %s223 = sphi 0, %s207
      %s229 = sphi 0, %s231
      %s232 = sphi 0, %s229
      %s233 = sphi 0, %s232
      %s249 = sphi 0, %s233
      %s255 = sphi 0, %s257
      %s258 = sphi 0, %s255
      %s259 = sphi 0, %s258
      %s275 = sphi 0, %s259
      %s281 = sphi 0, %s283
      %s284 = sphi 0, %s281
      %s285 = sphi 0, %s284
      %s301 = sphi 0, %s285
      %s307 = sphi 0, %s309
      %s310 = sphi 0, %s307
      %s311 = sphi 0, %s310
      %s327 = sphi 0, %s311
      %s333 = sphi 0, %s335
      %s336 = sphi 0, %s333
      %s337 = sphi 0, %s336
      %s353 = sphi 0, %s337
      %s359 = sphi 0, %s361
      %s362 = sphi 0, %s359
      %s363 = sphi 0, %s362
      %s379 = sphi 0, %s363
      %s383 = sphi 0, %s383
      %s385 = sphi 0, %s383
      %s386 = sphi 0, %s385
      %s400 = sphi 0, %s386
    $region4: #{tpu_custom_call.1} parent=1 // loop_header_branch
      %24 = sbr.rel (%p22) target = $region8
    $region5: #{tpu_custom_call.1} parent=1 // loop_body
      %s26 = ssub.s32 %s21, 1
      %s27 = ssub.s32 %s21, 2
      %s28 = sadd.s32 %s21, 1
      %s30 = sadd.s32 %s29, 1
      %p33 = scmp.eq.s32.totalorder %s21, 1
      %p34 = scmp.ne.s32.totalorder %s29, %s31
      %p35 = scmp.eq.s32.totalorder %s21, 0
      %p36 = por %p34, %p35
      %p37 = scmp.ne.s32.totalorder %s29, %s31
      %p38 = scmp.eq.s32.totalorder %s26, 1
      %p39 = por %p37, %p38
      %p40 = scmp.ne.s32.totalorder %s31, %s32
      %p41 = scmp.eq.s32.totalorder %s26, 0
      %p42 = por %p40, %p41
      %p43 = scmp.ne.s32.totalorder %s31, %s32
      %p44 = scmp.eq.s32.totalorder %s27, 1
      %p45 = por %p43, %p44
      %p47 = scmp.ne.s32.totalorder %s32, %s46
      %p48 = scmp.eq.s32.totalorder %s27, 0
      %p49 = por %p47, %p48
      %s51 = sadd.s32 %s50, 1
      %p54 = scmp.eq.s32.totalorder %s21, 1
      %p55 = scmp.ne.s32.totalorder %s50, %s52
      %p56 = scmp.eq.s32.totalorder %s21, 0
      %p57 = por %p55, %p56
      %p58 = scmp.ne.s32.totalorder %s50, %s52
      %p59 = scmp.eq.s32.totalorder %s26, 1
      %p60 = por %p58, %p59
      %p61 = scmp.ne.s32.totalorder %s52, %s53
      %p62 = scmp.eq.s32.totalorder %s26, 0
      %p63 = por %p61, %p62
      %p64 = scmp.ne.s32.totalorder %s52, %s53
      %p65 = scmp.eq.s32.totalorder %s27, 1
      %p66 = por %p64, %p65
      %p68 = scmp.ne.s32.totalorder %s53, %s67
      %p69 = scmp.eq.s32.totalorder %s27, 0
      %p70 = por %p68, %p69
      %s71 = ssub.s32 %s21, %s28
      %p72 = scmp.eq.s32.totalorder %s71, 0
      %s74 = sadd.s32 %s73, 1
      %s75 = scalar_select %p72, %s73, %s74
      %p78 = pneg %p72
      %p79 = scmp.eq.s32.totalorder %s21, 1
      %p80 = por %p78, %p79
      %p81 = scmp.ne.s32.totalorder %s73, %s76
      %p82 = scmp.eq.s32.totalorder %s21, 0
      %p83 = por %p81, %p82
      %p84 = scmp.ne.s32.totalorder %s73, %s76
      %p85 = scmp.eq.s32.totalorder %s26, 1
      %p86 = por %p84, %p85
      %p87 = scmp.ne.s32.totalorder %s76, %s77
      %p88 = scmp.eq.s32.totalorder %s26, 0
      %p89 = por %p87, %p88
      %p90 = scmp.ne.s32.totalorder %s76, %s77
      %p91 = scmp.eq.s32.totalorder %s27, 1
      %p92 = por %p90, %p91
      %p94 = scmp.ne.s32.totalorder %s77, %s93
      %p95 = scmp.eq.s32.totalorder %s27, 0
      %p96 = por %p94, %p95
      %s97 = ssub.s32 %s21, %s28
      %p98 = scmp.eq.s32.totalorder %s97, 0
      %s100 = sadd.s32 %s99, 1
      %s101 = scalar_select %p98, %s99, %s100
      %p104 = pneg %p98
      %p105 = scmp.eq.s32.totalorder %s21, 1
      %p106 = por %p104, %p105
      %p107 = scmp.ne.s32.totalorder %s99, %s102
      %p108 = scmp.eq.s32.totalorder %s21, 0
      %p109 = por %p107, %p108
      %p110 = scmp.ne.s32.totalorder %s99, %s102
      %p111 = scmp.eq.s32.totalorder %s26, 1
      %p112 = por %p110, %p111
      %p113 = scmp.ne.s32.totalorder %s102, %s103
      %p114 = scmp.eq.s32.totalorder %s26, 0
      %p115 = por %p113, %p114
      %p116 = scmp.ne.s32.totalorder %s102, %s103
      %p117 = scmp.eq.s32.totalorder %s27, 1
      %p118 = por %p116, %p117
      %p120 = scmp.ne.s32.totalorder %s103, %s119
      %p121 = scmp.eq.s32.totalorder %s27, 0
      %p122 = por %p120, %p121
      %s123 = ssub.s32 %s21, %s28
      %p124 = scmp.eq.s32.totalorder %s123, 0
      %s126 = sadd.s32 %s125, 1
      %s127 = scalar_select %p124, %s125, %s126
      %p130 = pneg %p124
      %p131 = scmp.eq.s32.totalorder %s21, 1
      %p132 = por %p130, %p131
      %p133 = scmp.ne.s32.totalorder %s125, %s128
      %p134 = scmp.eq.s32.totalorder %s21, 0
      %p135 = por %p133, %p134
      %p136 = scmp.ne.s32.totalorder %s125, %s128
      %p137 = scmp.eq.s32.totalorder %s26, 1
      %p138 = por %p136, %p137
      %p139 = scmp.ne.s32.totalorder %s128, %s129
      %p140 = scmp.eq.s32.totalorder %s26, 0
      %p141 = por %p139, %p140
      %p142 = scmp.ne.s32.totalorder %s128, %s129
      %p143 = scmp.eq.s32.totalorder %s27, 1
      %p144 = por %p142, %p143
      %p146 = scmp.ne.s32.totalorder %s129, %s145
      %p147 = scmp.eq.s32.totalorder %s27, 0
      %p148 = por %p146, %p147
      %s149 = ssub.s32 %s21, %s28
      %p150 = scmp.eq.s32.totalorder %s149, 0
      %s152 = sadd.s32 %s151, 1
      %s153 = scalar_select %p150, %s151, %s152
      %p156 = pneg %p150
      %p157 = scmp.eq.s32.totalorder %s21, 1
      %p158 = por %p156, %p157
      %p159 = scmp.ne.s32.totalorder %s151, %s154
      %p160 = scmp.eq.s32.totalorder %s21, 0
      %p161 = por %p159, %p160
      %p162 = scmp.ne.s32.totalorder %s151, %s154
      %p163 = scmp.eq.s32.totalorder %s26, 1
      %p164 = por %p162, %p163
      %p165 = scmp.ne.s32.totalorder %s154, %s155
      %p166 = scmp.eq.s32.totalorder %s26, 0
      %p167 = por %p165, %p166
      %p168 = scmp.ne.s32.totalorder %s154, %s155
      %p169 = scmp.eq.s32.totalorder %s27, 1
      %p170 = por %p168, %p169
      %p172 = scmp.ne.s32.totalorder %s155, %s171
      %p173 = scmp.eq.s32.totalorder %s27, 0
      %p174 = por %p172, %p173
      %s175 = ssub.s32 %s21, %s28
      %p176 = scmp.eq.s32.totalorder %s175, 0
      %s178 = sadd.s32 %s177, 1
      %s179 = scalar_select %p176, %s177, %s178
      %p182 = pneg %p176
      %p183 = scmp.eq.s32.totalorder %s21, 1
      %p184 = por %p182, %p183
      %p185 = scmp.ne.s32.totalorder %s177, %s180
      %p186 = scmp.eq.s32.totalorder %s21, 0
      %p187 = por %p185, %p186
      %p188 = scmp.ne.s32.totalorder %s177, %s180
      %p189 = scmp.eq.s32.totalorder %s26, 1
      %p190 = por %p188, %p189
      %p191 = scmp.ne.s32.totalorder %s180, %s181
      %p192 = scmp.eq.s32.totalorder %s26, 0
      %p193 = por %p191, %p192
      %p194 = scmp.ne.s32.totalorder %s180, %s181
      %p195 = scmp.eq.s32.totalorder %s27, 1
      %p196 = por %p194, %p195
      %p198 = scmp.ne.s32.totalorder %s181, %s197
      %p199 = scmp.eq.s32.totalorder %s27, 0
      %p200 = por %p198, %p199
      %s201 = ssub.s32 %s21, %s28
      %p202 = scmp.eq.s32.totalorder %s201, 0
      %s204 = sadd.s32 %s203, 1
      %s205 = scalar_select %p202, %s203, %s204
      %p208 = pneg %p202
      %p209 = scmp.eq.s32.totalorder %s21, 1
      %p210 = por %p208, %p209
      %p211 = scmp.ne.s32.totalorder %s203, %s206
      %p212 = scmp.eq.s32.totalorder %s21, 0
      %p213 = por %p211, %p212
      %p214 = scmp.ne.s32.totalorder %s203, %s206
      %p215 = scmp.eq.s32.totalorder %s26, 1
      %p216 = por %p214, %p215
      %p217 = scmp.ne.s32.totalorder %s206, %s207
      %p218 = scmp.eq.s32.totalorder %s26, 0
      %p219 = por %p217, %p218
      %p220 = scmp.ne.s32.totalorder %s206, %s207
      %p221 = scmp.eq.s32.totalorder %s27, 1
      %p222 = por %p220, %p221
      %p224 = scmp.ne.s32.totalorder %s207, %s223
      %p225 = scmp.eq.s32.totalorder %s27, 0
      %p226 = por %p224, %p225
      %s227 = ssub.s32 %s21, %s28
      %p228 = scmp.eq.s32.totalorder %s227, 0
      %s230 = sadd.s32 %s229, 1
      %s231 = scalar_select %p228, %s229, %s230
      %p234 = pneg %p228
      %p235 = scmp.eq.s32.totalorder %s21, 1
      %p236 = por %p234, %p235
      %p237 = scmp.ne.s32.totalorder %s229, %s232
      %p238 = scmp.eq.s32.totalorder %s21, 0
      %p239 = por %p237, %p238
      %p240 = scmp.ne.s32.totalorder %s229, %s232
      %p241 = scmp.eq.s32.totalorder %s26, 1
      %p242 = por %p240, %p241
      %p243 = scmp.ne.s32.totalorder %s232, %s233
      %p244 = scmp.eq.s32.totalorder %s26, 0
      %p245 = por %p243, %p244
      %p246 = scmp.ne.s32.totalorder %s232, %s233
      %p247 = scmp.eq.s32.totalorder %s27, 1
      %p248 = por %p246, %p247
      %p250 = scmp.ne.s32.totalorder %s233, %s249
      %p251 = scmp.eq.s32.totalorder %s27, 0
      %p252 = por %p250, %p251
      %s253 = ssub.s32 %s21, %s28
      %p254 = scmp.eq.s32.totalorder %s253, 0
      %s256 = sadd.s32 %s255, 1
      %s257 = scalar_select %p254, %s255, %s256
      %p260 = pneg %p254
      %p261 = scmp.eq.s32.totalorder %s21, 1
      %p262 = por %p260, %p261
      %p263 = scmp.ne.s32.totalorder %s255, %s258
      %p264 = scmp.eq.s32.totalorder %s21, 0
      %p265 = por %p263, %p264
      %p266 = scmp.ne.s32.totalorder %s255, %s258
      %p267 = scmp.eq.s32.totalorder %s26, 1
      %p268 = por %p266, %p267
      %p269 = scmp.ne.s32.totalorder %s258, %s259
      %p270 = scmp.eq.s32.totalorder %s26, 0
      %p271 = por %p269, %p270
      %p272 = scmp.ne.s32.totalorder %s258, %s259
      %p273 = scmp.eq.s32.totalorder %s27, 1
      %p274 = por %p272, %p273
      %p276 = scmp.ne.s32.totalorder %s259, %s275
      %p277 = scmp.eq.s32.totalorder %s27, 0
      %p278 = por %p276, %p277
      %s279 = ssub.s32 %s21, %s28
      %p280 = scmp.eq.s32.totalorder %s279, 0
      %s282 = sadd.s32 %s281, 1
      %s283 = scalar_select %p280, %s281, %s282
      %p286 = pneg %p280
      %p287 = scmp.eq.s32.totalorder %s21, 1
      %p288 = por %p286, %p287
      %p289 = scmp.ne.s32.totalorder %s281, %s284
      %p290 = scmp.eq.s32.totalorder %s21, 0
      %p291 = por %p289, %p290
      %p292 = scmp.ne.s32.totalorder %s281, %s284
      %p293 = scmp.eq.s32.totalorder %s26, 1
      %p294 = por %p292, %p293
      %p295 = scmp.ne.s32.totalorder %s284, %s285
      %p296 = scmp.eq.s32.totalorder %s26, 0
      %p297 = por %p295, %p296
      %p298 = scmp.ne.s32.totalorder %s284, %s285
      %p299 = scmp.eq.s32.totalorder %s27, 1
      %p300 = por %p298, %p299
      %p302 = scmp.ne.s32.totalorder %s285, %s301
      %p303 = scmp.eq.s32.totalorder %s27, 0
      %p304 = por %p302, %p303
      %s305 = ssub.s32 %s21, %s28
      %p306 = scmp.eq.s32.totalorder %s305, 0
      %s308 = sadd.s32 %s307, 1
      %s309 = scalar_select %p306, %s307, %s308
      %p312 = pneg %p306
      %p313 = scmp.eq.s32.totalorder %s21, 1
      %p314 = por %p312, %p313
      %p315 = scmp.ne.s32.totalorder %s307, %s310
      %p316 = scmp.eq.s32.totalorder %s21, 0
      %p317 = por %p315, %p316
      %p318 = scmp.ne.s32.totalorder %s307, %s310
      %p319 = scmp.eq.s32.totalorder %s26, 1
      %p320 = por %p318, %p319
      %p321 = scmp.ne.s32.totalorder %s310, %s311
      %p322 = scmp.eq.s32.totalorder %s26, 0
      %p323 = por %p321, %p322
      %p324 = scmp.ne.s32.totalorder %s310, %s311
      %p325 = scmp.eq.s32.totalorder %s27, 1
      %p326 = por %p324, %p325
      %p328 = scmp.ne.s32.totalorder %s311, %s327
      %p329 = scmp.eq.s32.totalorder %s27, 0
      %p330 = por %p328, %p329
      %s331 = ssub.s32 %s21, %s28
      %p332 = scmp.eq.s32.totalorder %s331, 0
      %s334 = sadd.s32 %s333, 1
      %s335 = scalar_select %p332, %s333, %s334
      %p338 = pneg %p332
      %p339 = scmp.eq.s32.totalorder %s21, 1
      %p340 = por %p338, %p339
      %p341 = scmp.ne.s32.totalorder %s333, %s336
      %p342 = scmp.eq.s32.totalorder %s21, 0
      %p343 = por %p341, %p342
      %p344 = scmp.ne.s32.totalorder %s333, %s336
      %p345 = scmp.eq.s32.totalorder %s26, 1
      %p346 = por %p344, %p345
      %p347 = scmp.ne.s32.totalorder %s336, %s337
      %p348 = scmp.eq.s32.totalorder %s26, 0
      %p349 = por %p347, %p348
      %p350 = scmp.ne.s32.totalorder %s336, %s337
      %p351 = scmp.eq.s32.totalorder %s27, 1
      %p352 = por %p350, %p351
      %p354 = scmp.ne.s32.totalorder %s337, %s353
      %p355 = scmp.eq.s32.totalorder %s27, 0
      %p356 = por %p354, %p355
      %s357 = ssub.s32 %s21, %s28
      %p358 = scmp.eq.s32.totalorder %s357, 0
      %s360 = sadd.s32 %s359, 1
      %s361 = scalar_select %p358, %s359, %s360
      %p364 = pneg %p358
      %p365 = scmp.eq.s32.totalorder %s21, 1
      %p366 = por %p364, %p365
      %p367 = scmp.ne.s32.totalorder %s359, %s362
      %p368 = scmp.eq.s32.totalorder %s21, 0
      %p369 = por %p367, %p368
      %p370 = scmp.ne.s32.totalorder %s359, %s362
      %p371 = scmp.eq.s32.totalorder %s26, 1
      %p372 = por %p370, %p371
      %p373 = scmp.ne.s32.totalorder %s362, %s363
      %p374 = scmp.eq.s32.totalorder %s26, 0
      %p375 = por %p373, %p374
      %p376 = scmp.ne.s32.totalorder %s362, %s363
      %p377 = scmp.eq.s32.totalorder %s27, 1
      %p378 = por %p376, %p377
      %p380 = scmp.ne.s32.totalorder %s363, %s379
      %p381 = scmp.eq.s32.totalorder %s27, 0
      %p382 = por %p380, %p381
      %s384 = sadd.s32 %s383, 1
      %p387 = scmp.eq.s32.totalorder %s21, 1
      %p388 = scmp.ne.s32.totalorder %s383, %s385
      %p389 = scmp.eq.s32.totalorder %s21, 0
      %p390 = por %p388, %p389
      %p391 = scmp.ne.s32.totalorder %s383, %s385
      %p392 = scmp.eq.s32.totalorder %s26, 1
      %p393 = por %p391, %p392
      %p394 = scmp.ne.s32.totalorder %s385, %s386
      %p395 = scmp.eq.s32.totalorder %s26, 0
      %p396 = por %p394, %p395
      %p397 = scmp.ne.s32.totalorder %s385, %s386
      %p398 = scmp.eq.s32.totalorder %s27, 1
      %p399 = por %p397, %p398
      %p401 = scmp.ne.s32.totalorder %s386, %s400
      %p402 = scmp.eq.s32.totalorder %s27, 0
      %p403 = por %p401, %p402
      %p404 = scmp.le.s32.totalorder 1, %s21
      %p405 = scmp.lt.s32.totalorder %s21, 3
      %p406 = pnand %p404, %p405
      %p407 = pneg %p406
      // Predicated region
      $region9: #{tpu_custom_call.1} parent=5 // pred_check
        _
      $region10: #{tpu_custom_call.1} parent=5 // pred_check_branch
        %409 = sbr.rel (%p406) target = $region12
      $region11: #{tpu_custom_call.1} parent=5 // pred_region
        %s410 = ssub.s32 %s21, 1
        // Predicated region
        $region13: #{tpu_custom_call.1} parent=11 // pred_check
          %p411 = pneg %p42
        $region14: #{tpu_custom_call.1} parent=11 // pred_check_branch
          %413 = sbr.rel (%p411) target = $region16
        $region15: #{tpu_custom_call.1} parent=11 // pred_region
          _
        $region16: #{tpu_custom_call.1} parent=11 // pred_fallthru
          _
        // Predicated region
        $region17: #{tpu_custom_call.1} parent=11 // pred_check
          %p414 = pneg %p63
        $region18: #{tpu_custom_call.1} parent=11 // pred_check_branch
          %416 = sbr.rel (%p414) target = $region20
        $region19: #{tpu_custom_call.1} parent=11 // pred_region
          _
        $region20: #{tpu_custom_call.1} parent=11 // pred_fallthru
          _
      $region12: #{tpu_custom_call.1} parent=5 // pred_fallthru
        _
      %p417 = scmp.lt.s32.totalorder %s21, 2
      // Predicated region
      $region21: #{tpu_custom_call.1} parent=5 // pred_check
        %p418 = pneg %p417
      $region22: #{tpu_custom_call.1} parent=5 // pred_check_branch
        %420 = sbr.rel (%p418) target = $region24
      $region23: #{tpu_custom_call.1} parent=5 // pred_region
        // Predicated region
        $region25: #{tpu_custom_call.1} parent=23 // pred_check
          %p421 = pneg %p83
        $region26: #{tpu_custom_call.1} parent=23 // pred_check_branch
          %423 = sbr.rel (%p421) target = $region28
        $region27: #{tpu_custom_call.1} parent=23 // pred_region
          %p424 = scmp.lt.s32.totalorder %s21, 1
          %s425 = scalar_select %p424, %s21, 1
          %s426 = smul.addr %s425, 4
          %s427 = scalar_lea.vmem %s2, %s426
        $region28: #{tpu_custom_call.1} parent=23 // pred_fallthru
          _
        // Predicated region
        $region29: #{tpu_custom_call.1} parent=23 // pred_check
          %p428 = pneg %p109
        $region30: #{tpu_custom_call.1} parent=23 // pred_check_branch
          %430 = sbr.rel (%p428) target = $region32
        $region31: #{tpu_custom_call.1} parent=23 // pred_region
          %p431 = scmp.lt.s32.totalorder %s21, 1
          %s432 = scalar_select %p431, %s21, 1
          %s433 = smul.addr %s432, 4
          %s434 = scalar_lea.vmem %s3, %s433
        $region32: #{tpu_custom_call.1} parent=23 // pred_fallthru
          _
        // Predicated region
        $region33: #{tpu_custom_call.1} parent=23 // pred_check
          %p435 = pneg %p135
        $region34: #{tpu_custom_call.1} parent=23 // pred_check_branch
          %437 = sbr.rel (%p435) target = $region36
        $region35: #{tpu_custom_call.1} parent=23 // pred_region
          %p438 = scmp.lt.s32.totalorder %s21, 1
          %s439 = scalar_select %p438, %s21, 1
          %s440 = smul.addr %s439, 2
          %s441 = scalar_lea.vmem %s4, %s440
        $region36: #{tpu_custom_call.1} parent=23 // pred_fallthru
          _
        // Predicated region
        $region37: #{tpu_custom_call.1} parent=23 // pred_check
          %p442 = pneg %p161
        $region38: #{tpu_custom_call.1} parent=23 // pred_check_branch
          %444 = sbr.rel (%p442) target = $region40
        $region39: #{tpu_custom_call.1} parent=23 // pred_region
          %p445 = scmp.lt.s32.totalorder %s21, 1
          %s446 = scalar_select %p445, %s21, 1
          %s447 = smul.addr %s446, 2
          %s448 = scalar_lea.vmem %s5, %s447
        $region40: #{tpu_custom_call.1} parent=23 // pred_fallthru
          _
        // Predicated region
        $region41: #{tpu_custom_call.1} parent=23 // pred_check
          %p449 = pneg %p187
        $region42: #{tpu_custom_call.1} parent=23 // pred_check_branch
          %451 = sbr.rel (%p449) target = $region44
        $region43: #{tpu_custom_call.1} parent=23 // pred_region
          %p452 = scmp.lt.s32.totalorder %s21, 1
          %s453 = scalar_select %p452, %s21, 1
          %s454 = smul.addr %s453, 2
          %s455 = scalar_lea.vmem %s6, %s454
        $region44: #{tpu_custom_call.1} parent=23 // pred_fallthru
          _
        // Predicated region
        $region45: #{tpu_custom_call.1} parent=23 // pred_check
          %p456 = pneg %p213
        $region46: #{tpu_custom_call.1} parent=23 // pred_check_branch
          %458 = sbr.rel (%p456) target = $region48
        $region47: #{tpu_custom_call.1} parent=23 // pred_region
          %p459 = scmp.lt.s32.totalorder %s21, 1
          %s460 = scalar_select %p459, %s21, 1
          %s461 = smul.addr %s460, 2
          %s462 = scalar_lea.vmem %s7, %s461
        $region48: #{tpu_custom_call.1} parent=23 // pred_fallthru
          _
        // Predicated region
        $region49: #{tpu_custom_call.1} parent=23 // pred_check
          %p463 = pneg %p239
        $region50: #{tpu_custom_call.1} parent=23 // pred_check_branch
          %465 = sbr.rel (%p463) target = $region52
        $region51: #{tpu_custom_call.1} parent=23 // pred_region
          %p466 = scmp.lt.s32.totalorder %s21, 1
          %s467 = scalar_select %p466, %s21, 1
          %s468 = smul.addr %s467, 9
          %s469 = smul.addr %s468, 2
          %s470 = scalar_lea.vmem %s8, %s469
        $region52: #{tpu_custom_call.1} parent=23 // pred_fallthru
          _
        // Predicated region
        $region53: #{tpu_custom_call.1} parent=23 // pred_check
          %p471 = pneg %p265
        $region54: #{tpu_custom_call.1} parent=23 // pred_check_branch
          %473 = sbr.rel (%p471) target = $region56
        $region55: #{tpu_custom_call.1} parent=23 // pred_region
          %p474 = scmp.lt.s32.totalorder %s21, 1
          %s475 = scalar_select %p474, %s21, 1
          %s476 = smul.addr %s475, 2
          %s477 = scalar_lea.vmem %s9, %s476
        $region56: #{tpu_custom_call.1} parent=23 // pred_fallthru
          _
        // Predicated region
        $region57: #{tpu_custom_call.1} parent=23 // pred_check
          %p478 = pneg %p291
        $region58: #{tpu_custom_call.1} parent=23 // pred_check_branch
          %480 = sbr.rel (%p478) target = $region60
        $region59: #{tpu_custom_call.1} parent=23 // pred_region
          %p481 = scmp.lt.s32.totalorder %s21, 1
          %s482 = scalar_select %p481, %s21, 1
          %s483 = smul.addr %s482, 2
          %s484 = scalar_lea.vmem %s10, %s483
        $region60: #{tpu_custom_call.1} parent=23 // pred_fallthru
          _
        // Predicated region
        $region61: #{tpu_custom_call.1} parent=23 // pred_check
          %p485 = pneg %p317
        $region62: #{tpu_custom_call.1} parent=23 // pred_check_branch
          %487 = sbr.rel (%p485) target = $region64
        $region63: #{tpu_custom_call.1} parent=23 // pred_region
          %p488 = scmp.lt.s32.totalorder %s21, 1
          %s489 = scalar_select %p488, %s21, 1
          %s490 = smul.addr %s489, 2
          %s491 = scalar_lea.vmem %s11, %s490
        $region64: #{tpu_custom_call.1} parent=23 // pred_fallthru
          _
        // Predicated region
        $region65: #{tpu_custom_call.1} parent=23 // pred_check
          %p492 = pneg %p343
        $region66: #{tpu_custom_call.1} parent=23 // pred_check_branch
          %494 = sbr.rel (%p492) target = $region68
        $region67: #{tpu_custom_call.1} parent=23 // pred_region
          %p495 = scmp.lt.s32.totalorder %s21, 1
          %s496 = scalar_select %p495, %s21, 1
          %s497 = smul.addr %s496, 4
          %s498 = scalar_lea.vmem %s12, %s497
        $region68: #{tpu_custom_call.1} parent=23 // pred_fallthru
          _
        // Predicated region
        $region69: #{tpu_custom_call.1} parent=23 // pred_check
          %p499 = pneg %p369
        $region70: #{tpu_custom_call.1} parent=23 // pred_check_branch
          %501 = sbr.rel (%p499) target = $region72
        $region71: #{tpu_custom_call.1} parent=23 // pred_region
          %p502 = scmp.lt.s32.totalorder %s21, 1
          %s503 = scalar_select %p502, %s21, 1
          %s504 = smul.addr %s503, 4
          %s505 = scalar_lea.vmem %s13, %s504
        $region72: #{tpu_custom_call.1} parent=23 // pred_fallthru
          _
      $region24: #{tpu_custom_call.1} parent=5 // pred_fallthru
        _
      %p506 = scmp.le.s32.totalorder 1, %s21
      %p507 = scmp.lt.s32.totalorder %s21, 3
      %p508 = pnand %p506, %p507
      %p509 = pneg %p508
      // Predicated region
      $region73: #{tpu_custom_call.1} parent=5 // pred_check
        _
      $region74: #{tpu_custom_call.1} parent=5 // pred_check_branch
        %511 = sbr.rel (%p508) target = $region76
      $region75: #{tpu_custom_call.1} parent=5 // pred_region
        %s512 = ssub.s32 %s21, 1
        %p513 = pneg %p42
        %p514 = pneg %p39
        %p515 = pneg %p63
        %p516 = pneg %p60
        %p517 = scmp.lt.s32.totalorder %s26, 1
        %s518 = scalar_select %p517, %s26, 1
        %s519 = smul.addr %s518, 4
        %s520 = scalar_lea.vmem %s2, %s519
        %p521 = pneg %p89
        %p522 = pneg %p86
        %p523 = scmp.lt.s32.totalorder %s26, 1
        %s524 = scalar_select %p523, %s26, 1
        %s525 = smul.addr %s524, 4
        %s526 = scalar_lea.vmem %s3, %s525
        %p527 = pneg %p115
        %p528 = pneg %p112
        %p529 = scmp.lt.s32.totalorder %s26, 1
        %s530 = scalar_select %p529, %s26, 1
        %s531 = smul.addr %s530, 2
        %s532 = scalar_lea.vmem %s4, %s531
        %p533 = pneg %p141
        %p534 = pneg %p138
        %p535 = scmp.lt.s32.totalorder %s26, 1
        %s536 = scalar_select %p535, %s26, 1
        %s537 = smul.addr %s536, 2
        %s538 = scalar_lea.vmem %s5, %s537
        %p539 = pneg %p167
        %p540 = pneg %p164
        %p541 = scmp.lt.s32.totalorder %s26, 1
        %s542 = scalar_select %p541, %s26, 1
        %s543 = smul.addr %s542, 2
        %s544 = scalar_lea.vmem %s6, %s543
        %p545 = pneg %p193
        %p546 = pneg %p190
        %p547 = scmp.lt.s32.totalorder %s26, 1
        %s548 = scalar_select %p547, %s26, 1
        %s549 = smul.addr %s548, 2
        %s550 = scalar_lea.vmem %s7, %s549
        %p551 = pneg %p219
        %p552 = pneg %p216
        %p553 = scmp.lt.s32.totalorder %s26, 1
        %s554 = scalar_select %p553, %s26, 1
        %s555 = smul.addr %s554, 9
        %s556 = smul.addr %s555, 2
        %s557 = scalar_lea.vmem %s8, %s556
        %p558 = pneg %p245
        %p559 = pneg %p242
        %p560 = scmp.lt.s32.totalorder %s26, 1
        %s561 = scalar_select %p560, %s26, 1
        %s562 = smul.addr %s561, 2
        %s563 = scalar_lea.vmem %s9, %s562
        %p564 = pneg %p271
        %p565 = pneg %p268
        %p566 = scmp.lt.s32.totalorder %s26, 1
        %s567 = scalar_select %p566, %s26, 1
        %s568 = smul.addr %s567, 2
        %s569 = scalar_lea.vmem %s10, %s568
        %p570 = pneg %p297
        %p571 = pneg %p294
        %p572 = scmp.lt.s32.totalorder %s26, 1
        %s573 = scalar_select %p572, %s26, 1
        %s574 = smul.addr %s573, 2
        %s575 = scalar_lea.vmem %s11, %s574
        %p576 = pneg %p323
        %p577 = pneg %p320
        %p578 = scmp.lt.s32.totalorder %s26, 1
        %s579 = scalar_select %p578, %s26, 1
        %s580 = smul.addr %s579, 4
        %s581 = scalar_lea.vmem %s12, %s580
        %p582 = pneg %p349
        %p583 = pneg %p346
        %p584 = scmp.lt.s32.totalorder %s26, 1
        %s585 = scalar_select %p584, %s26, 1
        %s586 = smul.addr %s585, 4
        %s587 = scalar_lea.vmem %s13, %s586
        %p588 = pneg %p375
        %p589 = pneg %p372
        %p590 = pneg %p396
        %p591 = pneg %p393
        %p592 = scmp.lt.s32.totalorder %s26, 1
        %s593 = scalar_select %p592, %s26, 1
        %s594 = smul.addr %s593, 4
        %s595 = scalar_lea.vmem %s2, %s594
        %p596 = scmp.lt.s32.totalorder %s26, 1
        %s597 = scalar_select %p596, %s26, 1
        %s598 = smul.addr %s597, 4
        %s599 = scalar_lea.vmem %s3, %s598
        %p600 = scmp.lt.s32.totalorder %s26, 1
        %s601 = scalar_select %p600, %s26, 1
        %s602 = smul.addr %s601, 2
        %s603 = scalar_lea.vmem %s4, %s602
        %p604 = scmp.lt.s32.totalorder %s26, 1
        %s605 = scalar_select %p604, %s26, 1
        %s606 = smul.addr %s605, 2
        %s607 = scalar_lea.vmem %s5, %s606
        %p608 = scmp.lt.s32.totalorder %s26, 1
        %s609 = scalar_select %p608, %s26, 1
        %s610 = smul.addr %s609, 2
        %s611 = scalar_lea.vmem %s6, %s610
        %p612 = scmp.lt.s32.totalorder %s26, 1
        %s613 = scalar_select %p612, %s26, 1
        %s614 = smul.addr %s613, 2
        %s615 = scalar_lea.vmem %s7, %s614
        %p616 = scmp.lt.s32.totalorder %s26, 1
        %s617 = scalar_select %p616, %s26, 1
        %s618 = smul.addr %s617, 9
        %s619 = smul.addr %s618, 2
        %s620 = scalar_lea.vmem %s8, %s619
        %p621 = scmp.lt.s32.totalorder %s26, 1
        %s622 = scalar_select %p621, %s26, 1
        %s623 = smul.addr %s622, 2
        %s624 = scalar_lea.vmem %s9, %s623
        %p625 = scmp.lt.s32.totalorder %s26, 1
        %s626 = scalar_select %p625, %s26, 1
        %s627 = smul.addr %s626, 2
        %s628 = scalar_lea.vmem %s10, %s627
        %p629 = scmp.lt.s32.totalorder %s26, 1
        %s630 = scalar_select %p629, %s26, 1
        %s631 = smul.addr %s630, 2
        %s632 = scalar_lea.vmem %s11, %s631
        %p633 = scmp.lt.s32.totalorder %s26, 1
        %s634 = scalar_select %p633, %s26, 1
        %s635 = smul.addr %s634, 4
        %s636 = scalar_lea.vmem %s12, %s635
        %p637 = scmp.lt.s32.totalorder %s26, 1
        %s638 = scalar_select %p637, %s26, 1
        %s639 = smul.addr %s638, 4
        %s640 = scalar_lea.vmem %s13, %s639
        %p641 = scmp.eq.s32.totalorder %s26, 0
        // Predicated region
        $region77: #{tpu_custom_call.1} parent=75 // pred_check
          %p642 = pneg %p641
        $region78: #{tpu_custom_call.1} parent=75 // pred_check_branch
          %644 = sbr.rel (%p642) target = $region80
        $region79: #{tpu_custom_call.1} parent=75 // pred_region
          %v645 = vld [vmem:[%s1] sm:$0xff]
          %v646 = vld [vmem:[%s1 + $0x8] sm:$0xff]
          %647 = vst [vmem:[#allocation2] sm:$0xff] %v645
          %648 = vst [vmem:[#allocation2 + $0x8] sm:$0xff] %v646
        $region80: #{tpu_custom_call.1} parent=75 // pred_fallthru
          _
        %v649 = vld [vmem:[#allocation2] sm:$0xff]
        %v650 = vld [vmem:[#allocation2 + $0x8] sm:$0xff]
        %v651 = vld [vmem:[%s595] sm:$0xf]
        %v652 = vld [vmem:[%s599] sm:$0xf]
        %v655 = vcombine.high %v649, %v649
        %v656 = vcombine.high %v650, %v650
        %vm659 = vcmask 1043456
        %v660 = vsel %vm659, %v649, 0.0
        %v661 = vsel %vm659, %v655, 0.0
        %v662 = vadd.f32 %v660, %v661
        %v663 = vsel %vm659, %v650, 0.0
        %v664 = vadd.f32 %v662, %v663
        %v665 = vsel %vm659, %v656, 0.0
        %v666 = vadd.f32 %v664, %v665
        %667 = vadd.xlane.f32.xlu0 %v666
        %v668 = vpop.xlane.xlu0 %667
        %v669 = vmul.f32 %v668, 0.001953125
        %v672 = vunpack.c.l.s4 839922192
        %v673 = vunpack.c.0.s8 %v672
        %v674 = vlaneseq
        %v675 = vshrl.u32 %v674, 7
        %v676 = vsub.s32 %v673, %v675
        %v677 = vrot.slane %v669, %v676
        %v679 = vsub.f32 %v649, %v677
        %v680 = vsub.f32 %v650, %v677
        %v681 = vmul.f32 %v679, %v679
        %v682 = vmul.f32 %v680, %v680
        %v685 = vcombine.high %v681, %v681
        %v686 = vcombine.high %v682, %v682
        %v689 = vsel %vm659, %v681, 0.0
        %v690 = vsel %vm659, %v685, 0.0
        %v691 = vadd.f32 %v689, %v690
        %v692 = vsel %vm659, %v682, 0.0
        %v693 = vadd.f32 %v691, %v692
        %v694 = vsel %vm659, %v686, 0.0
        %v695 = vadd.f32 %v693, %v694
        %696 = vadd.xlane.f32.xlu0 %v695
        %v697 = vpop.xlane.xlu0 %696
        %v698 = vmul.f32 %v697, 0.001953125
        %v699 = vadd.f32 %v698, 1e-05
        %v700 = vrsqrt.pop %v699
        %v701 = vmul.f32 %v651, %v700
        %703 = vset.pattern.permute.xlu0 0
        %704 = vperm.xlu0 %703, %v701
        %v705 = vpop.permute.xlu0 %704
        %v707 = vunpack.c.l.s4 839922192
        %v708 = vunpack.c.0.s8 %v707
        %v709 = vlaneseq
        %v710 = vshrl.u32 %v709, 7
        %v711 = vsub.s32 %v708, %v710
        %v712 = vrot.slane %v705, %v711
        %v714 = vmul.f32 %v679, %v712
        %v715 = vmul.f32 %v680, %v712
        %717 = vset.pattern.permute.xlu0 0
        %718 = vperm.xlu0 %717, %v652
        %v719 = vpop.permute.xlu0 %718
        %v721 = vunpack.c.l.s4 839922192
        %v722 = vunpack.c.0.s8 %v721
        %v723 = vlaneseq
        %v724 = vshrl.u32 %v723, 7
        %v725 = vsub.s32 %v722, %v724
        %v726 = vrot.slane %v719, %v725
        %v728 = vadd.f32 %v714, %v726
        %v729 = vadd.f32 %v715, %v726
        %v730 = vmax.f32 %v728, 0.0
        %v731 = vmax.f32 %v729, 0.0
        %v732 = vld [vmem:[%s603] sm:$0x3]
        %v735 = vlaneseq
        %v736 = vshrl.u32 %v735, 7
        %v737 = vsub.s32 0, %v736
        %v738 = vrot.slane %v730, %v737
        %v739 = vlaneseq
        %v740 = vshrl.u32 %v739, 7
        %v741 = vsub.s32 4, %v740
        %v742 = vrot.slane %v730, %v741
        %v743 = vlaneseq
        %v744 = vshrl.u32 %v743, 7
        %v745 = vsub.s32 0, %v744
        %v746 = vrot.slane %v731, %v745
        %v747 = vlaneseq
        %v748 = vshrl.u32 %v747, 7
        %v749 = vsub.s32 4, %v748
        %v750 = vrot.slane %v731, %v749
        %v755 = vlaneseq
        %v756 = vshrl.u32 %v755, 7
        %v757 = vsub.s32 0, %v756
        %v758 = vrot.slane %v738, %v757
        %v759 = vlaneseq
        %v760 = vshrl.u32 %v759, 7
        %v761 = vsub.s32 0, %v760
        %v762 = vrot.slane %v742, %v761
        %v763 = vlaneseq
        %v764 = vshrl.u32 %v763, 7
        %v765 = vsub.s32 0, %v764
        %v766 = vrot.slane %v746, %v765
        %v767 = vlaneseq
        %v768 = vshrl.u32 %v767, 7
        %v769 = vsub.s32 0, %v768
        %v770 = vrot.slane %v750, %v769
        %772 = vset.pattern.permute.xlu0 0
        %773 = vperm.xlu0 %772, %v732
        %v774 = vpop.permute.xlu0 %773
        %v776 = vmul.f32 %v758, %v774
        %v777 = vmul.f32 %v762, %v774
        %v778 = vmul.f32 %v766, %v774
        %v779 = vmul.f32 %v770, %v774
        %v780 = vlaneseq
        %v781 = vshrl.u32 %v780, 7
        %v782 = vsub.s32 1, %v781
        %v783 = vrot.slane %v730, %v782
        %v784 = vlaneseq
        %v785 = vshrl.u32 %v784, 7
        %v786 = vsub.s32 5, %v785
        %v787 = vrot.slane %v730, %v786
        %v788 = vlaneseq
        %v789 = vshrl.u32 %v788, 7
        %v790 = vsub.s32 1, %v789
        %v791 = vrot.slane %v731, %v790
        %v792 = vlaneseq
        %v793 = vshrl.u32 %v792, 7
        %v794 = vsub.s32 5, %v793
        %v795 = vrot.slane %v731, %v794
        %v800 = vlaneseq
        %v801 = vshrl.u32 %v800, 7
        %v802 = vsub.s32 1, %v801
        %v803 = vrot.slane %v783, %v802
        %v804 = vlaneseq
        %v805 = vshrl.u32 %v804, 7
        %v806 = vsub.s32 1, %v805
        %v807 = vrot.slane %v787, %v806
        %v808 = vlaneseq
        %v809 = vshrl.u32 %v808, 7
        %v810 = vsub.s32 1, %v809
        %v811 = vrot.slane %v791, %v810
        %v812 = vlaneseq
        %v813 = vshrl.u32 %v812, 7
        %v814 = vsub.s32 1, %v813
        %v815 = vrot.slane %v795, %v814
        %816 = vset.pattern.permute.xlu0 1
        %817 = vperm.xlu0 %816, %v732
        %v818 = vpop.permute.xlu0 %817
        %v820 = vmul.f32 %v803, %v818
        %v821 = vmul.f32 %v807, %v818
        %v822 = vmul.f32 %v811, %v818
        %v823 = vmul.f32 %v815, %v818
        %v824 = vadd.f32 %v776, %v820
        %v825 = vadd.f32 %v777, %v821
        %v826 = vadd.f32 %v778, %v822
        %v827 = vadd.f32 %v779, %v823
        %v828 = vlaneseq
        %v829 = vshrl.u32 %v828, 7
        %v830 = vsub.s32 2, %v829
        %v831 = vrot.slane %v730, %v830
        %v832 = vlaneseq
        %v833 = vshrl.u32 %v832, 7
        %v834 = vsub.s32 6, %v833
        %v835 = vrot.slane %v730, %v834
        %v836 = vlaneseq
        %v837 = vshrl.u32 %v836, 7
        %v838 = vsub.s32 2, %v837
        %v839 = vrot.slane %v731, %v838
        %v840 = vlaneseq
        %v841 = vshrl.u32 %v840, 7
        %v842 = vsub.s32 6, %v841
        %v843 = vrot.slane %v731, %v842
        %v848 = vlaneseq
        %v849 = vshrl.u32 %v848, 7
        %v850 = vsub.s32 2, %v849
        %v851 = vrot.slane %v831, %v850
        %v852 = vlaneseq
        %v853 = vshrl.u32 %v852, 7
        %v854 = vsub.s32 2, %v853
        %v855 = vrot.slane %v835, %v854
        %v856 = vlaneseq
        %v857 = vshrl.u32 %v856, 7
        %v858 = vsub.s32 2, %v857
        %v859 = vrot.slane %v839, %v858
        %v860 = vlaneseq
        %v861 = vshrl.u32 %v860, 7
        %v862 = vsub.s32 2, %v861
        %v863 = vrot.slane %v843, %v862
        %864 = vset.pattern.permute.xlu0 2
        %865 = vperm.xlu0 %864, %v732
        %v866 = vpop.permute.xlu0 %865
        %v868 = vmul.f32 %v851, %v866
        %v869 = vmul.f32 %v855, %v866
        %v870 = vmul.f32 %v859, %v866
        %v871 = vmul.f32 %v863, %v866
        %v872 = vadd.f32 %v824, %v868
        %v873 = vadd.f32 %v825, %v869
        %v874 = vadd.f32 %v826, %v870
        %v875 = vadd.f32 %v827, %v871
        %v876 = vlaneseq
        %v877 = vshrl.u32 %v876, 7
        %v878 = vsub.s32 3, %v877
        %v879 = vrot.slane %v730, %v878
        %v880 = vlaneseq
        %v881 = vshrl.u32 %v880, 7
        %v882 = vsub.s32 7, %v881
        %v883 = vrot.slane %v730, %v882
        %v884 = vlaneseq
        %v885 = vshrl.u32 %v884, 7
        %v886 = vsub.s32 3, %v885
        %v887 = vrot.slane %v731, %v886
        %v888 = vlaneseq
        %v889 = vshrl.u32 %v888, 7
        %v890 = vsub.s32 7, %v889
        %v891 = vrot.slane %v731, %v890
        %v896 = vlaneseq
        %v897 = vshrl.u32 %v896, 7
        %v898 = vsub.s32 3, %v897
        %v899 = vrot.slane %v879, %v898
        %v900 = vlaneseq
        %v901 = vshrl.u32 %v900, 7
        %v902 = vsub.s32 3, %v901
        %v903 = vrot.slane %v883, %v902
        %v904 = vlaneseq
        %v905 = vshrl.u32 %v904, 7
        %v906 = vsub.s32 3, %v905
        %v907 = vrot.slane %v887, %v906
        %v908 = vlaneseq
        %v909 = vshrl.u32 %v908, 7
        %v910 = vsub.s32 3, %v909
        %v911 = vrot.slane %v891, %v910
        %912 = vset.pattern.permute.xlu0 3
        %913 = vperm.xlu0 %912, %v732
        %v914 = vpop.permute.xlu0 %913
        %v916 = vmul.f32 %v899, %v914
        %v917 = vmul.f32 %v903, %v914
        %v918 = vmul.f32 %v907, %v914
        %v919 = vmul.f32 %v911, %v914
        %v920 = vadd.f32 %v872, %v916
        %v921 = vadd.f32 %v873, %v917
        %v922 = vadd.f32 %v874, %v918
        %v923 = vadd.f32 %v875, %v919
        %v924 = vld [vmem:[%s607] sm:$0x3]
        %926 = vset.pattern.permute.xlu0 0
        %927 = vperm.xlu0 %926, %v924
        %v928 = vpop.permute.xlu0 %927
        %v930 = vadd.f32 %v920, %v928
        %v931 = vadd.f32 %v921, %v928
        %v932 = vadd.f32 %v922, %v928
        %v933 = vadd.f32 %v923, %v928
        %v934 = vld [vmem:[%s611] sm:$0x3]
        %v935 = vld [vmem:[%s615] sm:$0x3]
        %vm936 = vcmask 1041408
        %v937 = vsel %vm936, %v930, 0.0
        %v938 = vsel %vm936, %v931, 0.0
        %v939 = vadd.f32 %v937, %v938
        %v940 = vsel %vm936, %v932, 0.0
        %v941 = vadd.f32 %v939, %v940
        %v942 = vsel %vm936, %v933, 0.0
        %v943 = vadd.f32 %v941, %v942
        %944 = vadd.xlane.f32.xlu0 %v943
        %v945 = vpop.xlane.xlu0 %944
        %v946 = vmul.f32 %v945, 0.001953125
        %v947 = vsub.f32 %v930, %v946
        %v948 = vsub.f32 %v931, %v946
        %v949 = vsub.f32 %v932, %v946
        %v950 = vsub.f32 %v933, %v946
        %v951 = vmul.f32 %v947, %v947
        %v952 = vmul.f32 %v948, %v948
        %v953 = vmul.f32 %v949, %v949
        %v954 = vmul.f32 %v950, %v950
        %v955 = vsel %vm936, %v951, 0.0
        %v956 = vsel %vm936, %v952, 0.0
        %v957 = vadd.f32 %v955, %v956
        %v958 = vsel %vm936, %v953, 0.0
        %v959 = vadd.f32 %v957, %v958
        %v960 = vsel %vm936, %v954, 0.0
        %v961 = vadd.f32 %v959, %v960
        %962 = vadd.xlane.f32.xlu0 %v961
        %v963 = vpop.xlane.xlu0 %962
        %v964 = vmul.f32 %v963, 0.001953125
        %v965 = vadd.f32 %v964, 1e-05
        %v966 = vrsqrt.pop %v965
        %v967 = vmul.f32 %v934, %v966
        %969 = vset.pattern.permute.xlu0 0
        %970 = vperm.xlu0 %969, %v967
        %v971 = vpop.permute.xlu0 %970
        %v973 = vmul.f32 %v947, %v971
        %v974 = vmul.f32 %v948, %v971
        %v975 = vmul.f32 %v949, %v971
        %v976 = vmul.f32 %v950, %v971
        %978 = vset.pattern.permute.xlu0 0
        %979 = vperm.xlu0 %978, %v935
        %v980 = vpop.permute.xlu0 %979
        %v982 = vadd.f32 %v973, %v980
        %v983 = vadd.f32 %v974, %v980
        %v984 = vadd.f32 %v975, %v980
        %v985 = vadd.f32 %v976, %v980
        %v986 = vmax.f32 %v982, 0.0
        %v987 = vmax.f32 %v983, 0.0
        %v988 = vmax.f32 %v984, 0.0
        %v989 = vmax.f32 %v985, 0.0
        %994 = vrot.lane.b32.xlu0 %v986, 17
        %v995 = vpop.permute.xlu0 %994
        %996 = vrot.lane.b32.xlu0 %v987, 17
        %v997 = vpop.permute.xlu0 %996
        %998 = vrot.lane.b32.xlu0 %v988, 17
        %v999 = vpop.permute.xlu0 %998
        %1000 = vrot.lane.b32.xlu0 %v989, 17
        %v1001 = vpop.permute.xlu0 %1000
        %vm1002 = vcmask 138240
        %v1003 = vsel %vm1002, %v995, %v997
        %v1004 = vsel %vm1002, %v997, %v999
        %v1005 = vsel %vm1002, %v999, %v1001
        %v1011 = vsel %vm1002, 0.0, %v995
        %v1012 = vsel %vm1002, %v1001, 0.0
        %v1013 = vld [vmem:[%s0] ss:$8 sm:$0xf]
        %v1015 = vlaneseq
        %v1016 = vshrl.u32 %v1015, 7
        %v1017 = vsub.s32 0, %v1016
        %v1018 = vrot.slane %v1013, %v1017
        %v1019 = vlaneseq
        %v1020 = vshrl.u32 %v1019, 7
        %v1021 = vsub.s32 1, %v1020
        %v1022 = vrot.slane %v1013, %v1021
        %v1023 = vlaneseq
        %v1024 = vshrl.u32 %v1023, 7
        %v1025 = vsub.s32 2, %v1024
        %v1026 = vrot.slane %v1013, %v1025
        %v1027 = vlaneseq
        %v1028 = vshrl.u32 %v1027, 7
        %v1029 = vsub.s32 3, %v1028
        %v1030 = vrot.slane %v1013, %v1029
        %v1035 = vmul.f32 %v1011, %v1018
        %v1036 = vmul.f32 %v1003, %v1022
        %v1037 = vmul.f32 %v1004, %v1026
        %v1038 = vmul.f32 %v1005, %v1030
        %v1039 = vld [vmem:[%s620] sm:$0x3]
        %v1040 = vlaneseq
        %v1041 = vshrl.u32 %v1040, 7
        %v1042 = vsub.s32 0, %v1041
        %v1043 = vrot.slane %v1035, %v1042
        %v1044 = vlaneseq
        %v1045 = vshrl.u32 %v1044, 7
        %v1046 = vsub.s32 0, %v1045
        %v1047 = vrot.slane %v1036, %v1046
        %v1048 = vlaneseq
        %v1049 = vshrl.u32 %v1048, 7
        %v1050 = vsub.s32 0, %v1049
        %v1051 = vrot.slane %v1037, %v1050
        %v1052 = vlaneseq
        %v1053 = vshrl.u32 %v1052, 7
        %v1054 = vsub.s32 0, %v1053
        %v1055 = vrot.slane %v1038, %v1054
        %1057 = vset.pattern.permute.xlu0 0
        %1058 = vperm.xlu0 %1057, %v1039
        %v1059 = vpop.permute.xlu0 %1058
        %v1061 = vmul.f32 %v1043, %v1059
        %v1062 = vmul.f32 %v1047, %v1059
        %v1063 = vmul.f32 %v1051, %v1059
        %v1064 = vmul.f32 %v1055, %v1059
        %v1065 = vlaneseq
        %v1066 = vshrl.u32 %v1065, 7
        %v1067 = vsub.s32 1, %v1066
        %v1068 = vrot.slane %v1035, %v1067
        %v1069 = vlaneseq
        %v1070 = vshrl.u32 %v1069, 7
        %v1071 = vsub.s32 1, %v1070
        %v1072 = vrot.slane %v1036, %v1071
        %v1073 = vlaneseq
        %v1074 = vshrl.u32 %v1073, 7
        %v1075 = vsub.s32 1, %v1074
        %v1076 = vrot.slane %v1037, %v1075
        %v1077 = vlaneseq
        %v1078 = vshrl.u32 %v1077, 7
        %v1079 = vsub.s32 1, %v1078
        %v1080 = vrot.slane %v1038, %v1079
        %1081 = vset.pattern.permute.xlu0 1
        %1082 = vperm.xlu0 %1081, %v1039
        %v1083 = vpop.permute.xlu0 %1082
        %v1085 = vmul.f32 %v1068, %v1083
        %v1086 = vmul.f32 %v1072, %v1083
        %v1087 = vmul.f32 %v1076, %v1083
        %v1088 = vmul.f32 %v1080, %v1083
        %v1089 = vadd.f32 %v1061, %v1085
        %v1090 = vadd.f32 %v1062, %v1086
        %v1091 = vadd.f32 %v1063, %v1087
        %v1092 = vadd.f32 %v1064, %v1088
        %s1093 = scalar_lea.vmem %s0, 1
        %v1094 = vld [vmem:[%s1093] ss:$8 sm:$0xf]
        %v1096 = vlaneseq
        %v1097 = vshrl.u32 %v1096, 7
        %v1098 = vsub.s32 0, %v1097
        %v1099 = vrot.slane %v1094, %v1098
        %v1100 = vlaneseq
        %v1101 = vshrl.u32 %v1100, 7
        %v1102 = vsub.s32 1, %v1101
        %v1103 = vrot.slane %v1094, %v1102
        %v1104 = vlaneseq
        %v1105 = vshrl.u32 %v1104, 7
        %v1106 = vsub.s32 2, %v1105
        %v1107 = vrot.slane %v1094, %v1106
        %v1108 = vlaneseq
        %v1109 = vshrl.u32 %v1108, 7
        %v1110 = vsub.s32 3, %v1109
        %v1111 = vrot.slane %v1094, %v1110
        %1112 = vrot.lane.b32.xlu0 %v1099, 1
        %v1113 = vpop.permute.xlu0 %1112
        %1114 = vrot.lane.b32.xlu0 %v1103, 1
        %v1115 = vpop.permute.xlu0 %1114
        %1116 = vrot.lane.b32.xlu0 %v1107, 1
        %v1117 = vpop.permute.xlu0 %1116
        %1118 = vrot.lane.b32.xlu0 %v1111, 1
        %v1119 = vpop.permute.xlu0 %1118
        %vm1120 = vcmask 7168
        %v1121 = vsel %vm1120, %v1113, %v1115
        %v1122 = vsel %vm1120, %v1115, %v1117
        %v1123 = vsel %vm1120, %v1117, %v1119
        %v1129 = vmul.f32 %v1011, %v1113
        %v1130 = vmul.f32 %v1003, %v1121
        %v1131 = vmul.f32 %v1004, %v1122
        %v1132 = vmul.f32 %v1005, %v1123
        %v1133 = vmul.f32 %v1012, %v1119
        %s1134 = scalar_lea.vmem %s620, 2
        %v1135 = vld [vmem:[%s1134] sm:$0x3]
        %v1136 = vlaneseq
        %v1137 = vshrl.u32 %v1136, 7
        %v1138 = vsub.s32 0, %v1137
        %v1139 = vrot.slane %v1129, %v1138
        %v1140 = vlaneseq
        %v1141 = vshrl.u32 %v1140, 7
        %v1142 = vsub.s32 0, %v1141
        %v1143 = vrot.slane %v1130, %v1142
        %v1144 = vlaneseq
        %v1145 = vshrl.u32 %v1144, 7
        %v1146 = vsub.s32 0, %v1145
        %v1147 = vrot.slane %v1131, %v1146
        %v1148 = vlaneseq
        %v1149 = vshrl.u32 %v1148, 7
        %v1150 = vsub.s32 0, %v1149
        %v1151 = vrot.slane %v1132, %v1150
        %v1152 = vlaneseq
        %v1153 = vshrl.u32 %v1152, 7
        %v1154 = vsub.s32 0, %v1153
        %v1155 = vrot.slane %v1133, %v1154
        %1157 = vset.pattern.permute.xlu0 0
        %1158 = vperm.xlu0 %1157, %v1135
        %v1159 = vpop.permute.xlu0 %1158
        %v1161 = vmul.f32 %v1139, %v1159
        %v1162 = vmul.f32 %v1143, %v1159
        %v1163 = vmul.f32 %v1147, %v1159
        %v1164 = vmul.f32 %v1151, %v1159
        %v1165 = vmul.f32 %v1155, %v1159
        %1171 = vrot.lane.b32.xlu0 %v1161, 127
        %v1172 = vpop.permute.xlu0 %1171
        %1173 = vrot.lane.b32.xlu0 %v1162, 127
        %v1174 = vpop.permute.xlu0 %1173
        %1175 = vrot.lane.b32.xlu0 %v1163, 127
        %v1176 = vpop.permute.xlu0 %1175
        %1177 = vrot.lane.b32.xlu0 %v1164, 127
        %v1178 = vpop.permute.xlu0 %1177
        %1179 = vrot.lane.b32.xlu0 %v1165, 127
        %v1180 = vpop.permute.xlu0 %1179
        %vm1181 = vcmask 1039360
        %v1182 = vsel %vm1181, %v1172, %v1174
        %v1183 = vsel %vm1181, %v1174, %v1176
        %v1184 = vsel %vm1181, %v1176, %v1178
        %v1185 = vsel %vm1181, %v1178, %v1180
        %v1190 = vadd.f32 %v1089, %v1182
        %v1191 = vadd.f32 %v1090, %v1183
        %v1192 = vadd.f32 %v1091, %v1184
        %v1193 = vadd.f32 %v1092, %v1185
        %v1194 = vlaneseq
        %v1195 = vshrl.u32 %v1194, 7
        %v1196 = vsub.s32 1, %v1195
        %v1197 = vrot.slane %v1129, %v1196
        %v1198 = vlaneseq
        %v1199 = vshrl.u32 %v1198, 7
        %v1200 = vsub.s32 1, %v1199
        %v1201 = vrot.slane %v1130, %v1200
        %v1202 = vlaneseq
        %v1203 = vshrl.u32 %v1202, 7
        %v1204 = vsub.s32 1, %v1203
        %v1205 = vrot.slane %v1131, %v1204
        %v1206 = vlaneseq
        %v1207 = vshrl.u32 %v1206, 7
        %v1208 = vsub.s32 1, %v1207
        %v1209 = vrot.slane %v1132, %v1208
        %v1210 = vlaneseq
        %v1211 = vshrl.u32 %v1210, 7
        %v1212 = vsub.s32 1, %v1211
        %v1213 = vrot.slane %v1133, %v1212
        %1214 = vset.pattern.permute.xlu0 1
        %1215 = vperm.xlu0 %1214, %v1135
        %v1216 = vpop.permute.xlu0 %1215
        %v1218 = vmul.f32 %v1197, %v1216
        %v1219 = vmul.f32 %v1201, %v1216
        %v1220 = vmul.f32 %v1205, %v1216
        %v1221 = vmul.f32 %v1209, %v1216
        %v1222 = vmul.f32 %v1213, %v1216
        %1228 = vrot.lane.b32.xlu0 %v1218, 127
        %v1229 = vpop.permute.xlu0 %1228
        %1230 = vrot.lane.b32.xlu0 %v1219, 127
        %v1231 = vpop.permute.xlu0 %1230
        %1232 = vrot.lane.b32.xlu0 %v1220, 127
        %v1233 = vpop.permute.xlu0 %1232
        %1234 = vrot.lane.b32.xlu0 %v1221, 127
        %v1235 = vpop.permute.xlu0 %1234
        %1236 = vrot.lane.b32.xlu0 %v1222, 127
        %v1237 = vpop.permute.xlu0 %1236
        %v1238 = vsel %vm1181, %v1229, %v1231
        %v1239 = vsel %vm1181, %v1231, %v1233
        %v1240 = vsel %vm1181, %v1233, %v1235
        %v1241 = vsel %vm1181, %v1235, %v1237
        %v1246 = vadd.f32 %v1190, %v1238
        %v1247 = vadd.f32 %v1191, %v1239
        %v1248 = vadd.f32 %v1192, %v1240
        %v1249 = vadd.f32 %v1193, %v1241
        %s1250 = scalar_lea.vmem %s0, 2
        %v1251 = vld [vmem:[%s1250] ss:$8 sm:$0xf]
        %v1253 = vlaneseq
        %v1254 = vshrl.u32 %v1253, 7
        %v1255 = vsub.s32 0, %v1254
        %v1256 = vrot.slane %v1251, %v1255
        %v1257 = vlaneseq
        %v1258 = vshrl.u32 %v1257, 7
        %v1259 = vsub.s32 1, %v1258
        %v1260 = vrot.slane %v1251, %v1259
        %v1261 = vlaneseq
        %v1262 = vshrl.u32 %v1261, 7
        %v1263 = vsub.s32 2, %v1262
        %v1264 = vrot.slane %v1251, %v1263
        %v1265 = vlaneseq
        %v1266 = vshrl.u32 %v1265, 7
        %v1267 = vsub.s32 3, %v1266
        %v1268 = vrot.slane %v1251, %v1267
        %1269 = vrot.lane.b32.xlu0 %v1256, 2
        %v1270 = vpop.permute.xlu0 %1269
        %1271 = vrot.lane.b32.xlu0 %v1260, 2
        %v1272 = vpop.permute.xlu0 %1271
        %1273 = vrot.lane.b32.xlu0 %v1264, 2
        %v1274 = vpop.permute.xlu0 %1273
        %1275 = vrot.lane.b32.xlu0 %v1268, 2
        %v1276 = vpop.permute.xlu0 %1275
        %vm1277 = vcmask 15360
        %v1278 = vsel %vm1277, %v1270, %v1272
        %v1279 = vsel %vm1277, %v1272, %v1274
        %v1280 = vsel %vm1277, %v1274, %v1276
        %v1286 = vmul.f32 %v1011, %v1270
        %v1287 = vmul.f32 %v1003, %v1278
        %v1288 = vmul.f32 %v1004, %v1279
        %v1289 = vmul.f32 %v1005, %v1280
        %v1290 = vmul.f32 %v1012, %v1276
        %s1291 = scalar_lea.vmem %s620, 4
        %v1292 = vld [vmem:[%s1291] sm:$0x3]
        %v1293 = vlaneseq
        %v1294 = vshrl.u32 %v1293, 7
        %v1295 = vsub.s32 0, %v1294
        %v1296 = vrot.slane %v1286, %v1295
        %v1297 = vlaneseq
        %v1298 = vshrl.u32 %v1297, 7
        %v1299 = vsub.s32 0, %v1298
        %v1300 = vrot.slane %v1287, %v1299
        %v1301 = vlaneseq
        %v1302 = vshrl.u32 %v1301, 7
        %v1303 = vsub.s32 0, %v1302
        %v1304 = vrot.slane %v1288, %v1303
        %v1305 = vlaneseq
        %v1306 = vshrl.u32 %v1305, 7
        %v1307 = vsub.s32 0, %v1306
        %v1308 = vrot.slane %v1289, %v1307
        %v1309 = vlaneseq
        %v1310 = vshrl.u32 %v1309, 7
        %v1311 = vsub.s32 0, %v1310
        %v1312 = vrot.slane %v1290, %v1311
        %1314 = vset.pattern.permute.xlu0 0
        %1315 = vperm.xlu0 %1314, %v1292
        %v1316 = vpop.permute.xlu0 %1315
        %v1318 = vmul.f32 %v1296, %v1316
        %v1319 = vmul.f32 %v1300, %v1316
        %v1320 = vmul.f32 %v1304, %v1316
        %v1321 = vmul.f32 %v1308, %v1316
        %v1322 = vmul.f32 %v1312, %v1316
        %1328 = vrot.lane.b32.xlu0 %v1318, 126
        %v1329 = vpop.permute.xlu0 %1328
        %1330 = vrot.lane.b32.xlu0 %v1319, 126
        %v1331 = vpop.permute.xlu0 %1330
        %1332 = vrot.lane.b32.xlu0 %v1320, 126
        %v1333 = vpop.permute.xlu0 %1332
        %1334 = vrot.lane.b32.xlu0 %v1321, 126
        %v1335 = vpop.permute.xlu0 %1334
        %1336 = vrot.lane.b32.xlu0 %v1322, 126
        %v1337 = vpop.permute.xlu0 %1336
        %vm1338 = vcmask 1031168
        %v1339 = vsel %vm1338, %v1329, %v1331
        %v1340 = vsel %vm1338, %v1331, %v1333
        %v1341 = vsel %vm1338, %v1333, %v1335
        %v1342 = vsel %vm1338, %v1335, %v1337
        %v1347 = vadd.f32 %v1246, %v1339
        %v1348 = vadd.f32 %v1247, %v1340
        %v1349 = vadd.f32 %v1248, %v1341
        %v1350 = vadd.f32 %v1249, %v1342
        %v1351 = vlaneseq
        %v1352 = vshrl.u32 %v1351, 7
        %v1353 = vsub.s32 1, %v1352
        %v1354 = vrot.slane %v1286, %v1353
        %v1355 = vlaneseq
        %v1356 = vshrl.u32 %v1355, 7
        %v1357 = vsub.s32 1, %v1356
        %v1358 = vrot.slane %v1287, %v1357
        %v1359 = vlaneseq
        %v1360 = vshrl.u32 %v1359, 7
        %v1361 = vsub.s32 1, %v1360
        %v1362 = vrot.slane %v1288, %v1361
        %v1363 = vlaneseq
        %v1364 = vshrl.u32 %v1363, 7
        %v1365 = vsub.s32 1, %v1364
        %v1366 = vrot.slane %v1289, %v1365
        %v1367 = vlaneseq
        %v1368 = vshrl.u32 %v1367, 7
        %v1369 = vsub.s32 1, %v1368
        %v1370 = vrot.slane %v1290, %v1369
        %1371 = vset.pattern.permute.xlu0 1
        %1372 = vperm.xlu0 %1371, %v1292
        %v1373 = vpop.permute.xlu0 %1372
        %v1375 = vmul.f32 %v1354, %v1373
        %v1376 = vmul.f32 %v1358, %v1373
        %v1377 = vmul.f32 %v1362, %v1373
        %v1378 = vmul.f32 %v1366, %v1373
        %v1379 = vmul.f32 %v1370, %v1373
        %1385 = vrot.lane.b32.xlu0 %v1375, 126
        %v1386 = vpop.permute.xlu0 %1385
        %1387 = vrot.lane.b32.xlu0 %v1376, 126
        %v1388 = vpop.permute.xlu0 %1387
        %1389 = vrot.lane.b32.xlu0 %v1377, 126
        %v1390 = vpop.permute.xlu0 %1389
        %1391 = vrot.lane.b32.xlu0 %v1378, 126
        %v1392 = vpop.permute.xlu0 %1391
        %1393 = vrot.lane.b32.xlu0 %v1379, 126
        %v1394 = vpop.permute.xlu0 %1393
        %v1395 = vsel %vm1338, %v1386, %v1388
        %v1396 = vsel %vm1338, %v1388, %v1390
        %v1397 = vsel %vm1338, %v1390, %v1392
        %v1398 = vsel %vm1338, %v1392, %v1394
        %v1403 = vadd.f32 %v1347, %v1395
        %v1404 = vadd.f32 %v1348, %v1396
        %v1405 = vadd.f32 %v1349, %v1397
        %v1406 = vadd.f32 %v1350, %v1398
        %s1407 = scalar_lea.vmem %s0, 3
        %v1408 = vld [vmem:[%s1407] ss:$8 sm:$0xf]
        %v1410 = vlaneseq
        %v1411 = vshrl.u32 %v1410, 7
        %v1412 = vsub.s32 0, %v1411
        %v1413 = vrot.slane %v1408, %v1412
        %v1414 = vlaneseq
        %v1415 = vshrl.u32 %v1414, 7
        %v1416 = vsub.s32 1, %v1415
        %v1417 = vrot.slane %v1408, %v1416
        %v1418 = vlaneseq
        %v1419 = vshrl.u32 %v1418, 7
        %v1420 = vsub.s32 2, %v1419
        %v1421 = vrot.slane %v1408, %v1420
        %v1422 = vlaneseq
        %v1423 = vshrl.u32 %v1422, 7
        %v1424 = vsub.s32 3, %v1423
        %v1425 = vrot.slane %v1408, %v1424
        %1426 = vrot.lane.b32.xlu0 %v1413, 16
        %v1427 = vpop.permute.xlu0 %1426
        %1428 = vrot.lane.b32.xlu0 %v1417, 16
        %v1429 = vpop.permute.xlu0 %1428
        %1430 = vrot.lane.b32.xlu0 %v1421, 16
        %v1431 = vpop.permute.xlu0 %1430
        %1432 = vrot.lane.b32.xlu0 %v1425, 16
        %v1433 = vpop.permute.xlu0 %1432
        %vm1434 = vcmask 130048
        %v1435 = vsel %vm1434, %v1427, %v1429
        %v1436 = vsel %vm1434, %v1429, %v1431
        %v1437 = vsel %vm1434, %v1431, %v1433
        %v1443 = vmul.f32 %v1011, %v1427
        %v1444 = vmul.f32 %v1003, %v1435
        %v1445 = vmul.f32 %v1004, %v1436
        %v1446 = vmul.f32 %v1005, %v1437
        %v1447 = vmul.f32 %v1012, %v1433
        %s1448 = scalar_lea.vmem %s620, 6
        %v1449 = vld [vmem:[%s1448] sm:$0x3]
        %v1450 = vlaneseq
        %v1451 = vshrl.u32 %v1450, 7
        %v1452 = vsub.s32 0, %v1451
        %v1453 = vrot.slane %v1443, %v1452
        %v1454 = vlaneseq
        %v1455 = vshrl.u32 %v1454, 7
        %v1456 = vsub.s32 0, %v1455
        %v1457 = vrot.slane %v1444, %v1456
        %v1458 = vlaneseq
        %v1459 = vshrl.u32 %v1458, 7
        %v1460 = vsub.s32 0, %v1459
        %v1461 = vrot.slane %v1445, %v1460
        %v1462 = vlaneseq
        %v1463 = vshrl.u32 %v1462, 7
        %v1464 = vsub.s32 0, %v1463
        %v1465 = vrot.slane %v1446, %v1464
        %v1466 = vlaneseq
        %v1467 = vshrl.u32 %v1466, 7
        %v1468 = vsub.s32 0, %v1467
        %v1469 = vrot.slane %v1447, %v1468
        %1471 = vset.pattern.permute.xlu0 0
        %1472 = vperm.xlu0 %1471, %v1449
        %v1473 = vpop.permute.xlu0 %1472
        %v1475 = vmul.f32 %v1453, %v1473
        %v1476 = vmul.f32 %v1457, %v1473
        %v1477 = vmul.f32 %v1461, %v1473
        %v1478 = vmul.f32 %v1465, %v1473
        %v1479 = vmul.f32 %v1469, %v1473
        %1485 = vrot.lane.b32.xlu0 %v1475, 112
        %v1486 = vpop.permute.xlu0 %1485
        %1487 = vrot.lane.b32.xlu0 %v1476, 112
        %v1488 = vpop.permute.xlu0 %1487
        %1489 = vrot.lane.b32.xlu0 %v1477, 112
        %v1490 = vpop.permute.xlu0 %1489
        %1491 = vrot.lane.b32.xlu0 %v1478, 112
        %v1492 = vpop.permute.xlu0 %1491
        %1493 = vrot.lane.b32.xlu0 %v1479, 112
        %v1494 = vpop.permute.xlu0 %1493
        %vm1495 = vcmask 916480
        %v1496 = vsel %vm1495, %v1486, %v1488
        %v1497 = vsel %vm1495, %v1488, %v1490
        %v1498 = vsel %vm1495, %v1490, %v1492
        %v1499 = vsel %vm1495, %v1492, %v1494
        %v1504 = vadd.f32 %v1403, %v1496
        %v1505 = vadd.f32 %v1404, %v1497
        %v1506 = vadd.f32 %v1405, %v1498
        %v1507 = vadd.f32 %v1406, %v1499
        %v1508 = vlaneseq
        %v1509 = vshrl.u32 %v1508, 7
        %v1510 = vsub.s32 1, %v1509
        %v1511 = vrot.slane %v1443, %v1510
        %v1512 = vlaneseq
        %v1513 = vshrl.u32 %v1512, 7
        %v1514 = vsub.s32 1, %v1513
        %v1515 = vrot.slane %v1444, %v1514
        %v1516 = vlaneseq
        %v1517 = vshrl.u32 %v1516, 7
        %v1518 = vsub.s32 1, %v1517
        %v1519 = vrot.slane %v1445, %v1518
        %v1520 = vlaneseq
        %v1521 = vshrl.u32 %v1520, 7
        %v1522 = vsub.s32 1, %v1521
        %v1523 = vrot.slane %v1446, %v1522
        %v1524 = vlaneseq
        %v1525 = vshrl.u32 %v1524, 7
        %v1526 = vsub.s32 1, %v1525
        %v1527 = vrot.slane %v1447, %v1526
        %1528 = vset.pattern.permute.xlu0 1
        %1529 = vperm.xlu0 %1528, %v1449
        %v1530 = vpop.permute.xlu0 %1529
        %v1532 = vmul.f32 %v1511, %v1530
        %v1533 = vmul.f32 %v1515, %v1530
        %v1534 = vmul.f32 %v1519, %v1530
        %v1535 = vmul.f32 %v1523, %v1530
        %v1536 = vmul.f32 %v1527, %v1530
        %1542 = vrot.lane.b32.xlu0 %v1532, 112
        %v1543 = vpop.permute.xlu0 %1542
        %1544 = vrot.lane.b32.xlu0 %v1533, 112
        %v1545 = vpop.permute.xlu0 %1544
        %1546 = vrot.lane.b32.xlu0 %v1534, 112
        %v1547 = vpop.permute.xlu0 %1546
        %1548 = vrot.lane.b32.xlu0 %v1535, 112
        %v1549 = vpop.permute.xlu0 %1548
        %1550 = vrot.lane.b32.xlu0 %v1536, 112
        %v1551 = vpop.permute.xlu0 %1550
        %v1552 = vsel %vm1495, %v1543, %v1545
        %v1553 = vsel %vm1495, %v1545, %v1547
        %v1554 = vsel %vm1495, %v1547, %v1549
        %v1555 = vsel %vm1495, %v1549, %v1551
        %v1560 = vadd.f32 %v1504, %v1552
        %v1561 = vadd.f32 %v1505, %v1553
        %v1562 = vadd.f32 %v1506, %v1554
        %v1563 = vadd.f32 %v1507, %v1555
        %s1564 = scalar_lea.vmem %s620, 8
        %v1565 = vld [vmem:[%s1564] sm:$0x3]
        %v1566 = vlaneseq
        %v1567 = vshrl.u32 %v1566, 7
        %v1568 = vsub.s32 0, %v1567
        %v1569 = vrot.slane %v1011, %v1568
        %v1570 = vlaneseq
        %v1571 = vshrl.u32 %v1570, 7
        %v1572 = vsub.s32 0, %v1571
        %v1573 = vrot.slane %v1003, %v1572
        %v1574 = vlaneseq
        %v1575 = vshrl.u32 %v1574, 7
        %v1576 = vsub.s32 0, %v1575
        %v1577 = vrot.slane %v1004, %v1576
        %v1578 = vlaneseq
        %v1579 = vshrl.u32 %v1578, 7
        %v1580 = vsub.s32 0, %v1579
        %v1581 = vrot.slane %v1005, %v1580
        %v1582 = vlaneseq
        %v1583 = vshrl.u32 %v1582, 7
        %v1584 = vsub.s32 0, %v1583
        %v1585 = vrot.slane %v1012, %v1584
        %1587 = vset.pattern.permute.xlu0 0
        %1588 = vperm.xlu0 %1587, %v1565
        %v1589 = vpop.permute.xlu0 %1588
        %v1591 = vmul.f32 %v1569, %v1589
        %v1592 = vmul.f32 %v1573, %v1589
        %v1593 = vmul.f32 %v1577, %v1589
        %v1594 = vmul.f32 %v1581, %v1589
        %v1595 = vmul.f32 %v1585, %v1589
        %1601 = vrot.lane.b32.xlu0 %v1591, 111
        %v1602 = vpop.permute.xlu0 %1601
        %1603 = vrot.lane.b32.xlu0 %v1592, 111
        %v1604 = vpop.permute.xlu0 %1603
        %1605 = vrot.lane.b32.xlu0 %v1593, 111
        %v1606 = vpop.permute.xlu0 %1605
        %1607 = vrot.lane.b32.xlu0 %v1594, 111
        %v1608 = vpop.permute.xlu0 %1607
        %1609 = vrot.lane.b32.xlu0 %v1595, 111
        %v1610 = vpop.permute.xlu0 %1609
        %vm1611 = vcmask 908288
        %v1612 = vsel %vm1611, %v1602, %v1604
        %v1613 = vsel %vm1611, %v1604, %v1606
        %v1614 = vsel %vm1611, %v1606, %v1608
        %v1615 = vsel %vm1611, %v1608, %v1610
        %v1620 = vadd.f32 %v1560, %v1612
        %v1621 = vadd.f32 %v1561, %v1613
        %v1622 = vadd.f32 %v1562, %v1614
        %v1623 = vadd.f32 %v1563, %v1615
        %v1624 = vlaneseq
        %v1625 = vshrl.u32 %v1624, 7
        %v1626 = vsub.s32 1, %v1625
        %v1627 = vrot.slane %v1011, %v1626
        %v1628 = vlaneseq
        %v1629 = vshrl.u32 %v1628, 7
        %v1630 = vsub.s32 1, %v1629
        %v1631 = vrot.slane %v1003, %v1630
        %v1632 = vlaneseq
        %v1633 = vshrl.u32 %v1632, 7
        %v1634 = vsub.s32 1, %v1633
        %v1635 = vrot.slane %v1004, %v1634
        %v1636 = vlaneseq
        %v1637 = vshrl.u32 %v1636, 7
        %v1638 = vsub.s32 1, %v1637
        %v1639 = vrot.slane %v1005, %v1638
        %v1640 = vlaneseq
        %v1641 = vshrl.u32 %v1640, 7
        %v1642 = vsub.s32 1, %v1641
        %v1643 = vrot.slane %v1012, %v1642
        %1644 = vset.pattern.permute.xlu0 1
        %1645 = vperm.xlu0 %1644, %v1565
        %v1646 = vpop.permute.xlu0 %1645
        %v1648 = vmul.f32 %v1627, %v1646
        %v1649 = vmul.f32 %v1631, %v1646
        %v1650 = vmul.f32 %v1635, %v1646
        %v1651 = vmul.f32 %v1639, %v1646
        %v1652 = vmul.f32 %v1643, %v1646
        %1658 = vrot.lane.b32.xlu0 %v1648, 111
        %v1659 = vpop.permute.xlu0 %1658
        %1660 = vrot.lane.b32.xlu0 %v1649, 111
        %v1661 = vpop.permute.xlu0 %1660
        %1662 = vrot.lane.b32.xlu0 %v1650, 111
        %v1663 = vpop.permute.xlu0 %1662
        %1664 = vrot.lane.b32.xlu0 %v1651, 111
        %v1665 = vpop.permute.xlu0 %1664
        %1666 = vrot.lane.b32.xlu0 %v1652, 111
        %v1667 = vpop.permute.xlu0 %1666
        %v1668 = vsel %vm1611, %v1659, %v1661
        %v1669 = vsel %vm1611, %v1661, %v1663
        %v1670 = vsel %vm1611, %v1663, %v1665
        %v1671 = vsel %vm1611, %v1665, %v1667
        %v1676 = vadd.f32 %v1620, %v1668
        %v1677 = vadd.f32 %v1621, %v1669
        %v1678 = vadd.f32 %v1622, %v1670
        %v1679 = vadd.f32 %v1623, %v1671
        %s1680 = scalar_lea.vmem %s0, 5
        %v1681 = vld [vmem:[%s1680] ss:$8 sm:$0xf]
        %v1683 = vlaneseq
        %v1684 = vshrl.u32 %v1683, 7
        %v1685 = vsub.s32 0, %v1684
        %v1686 = vrot.slane %v1681, %v1685
        %v1687 = vlaneseq
        %v1688 = vshrl.u32 %v1687, 7
        %v1689 = vsub.s32 1, %v1688
        %v1690 = vrot.slane %v1681, %v1689
        %v1691 = vlaneseq
        %v1692 = vshrl.u32 %v1691, 7
        %v1693 = vsub.s32 2, %v1692
        %v1694 = vrot.slane %v1681, %v1693
        %v1695 = vlaneseq
        %v1696 = vshrl.u32 %v1695, 7
        %v1697 = vsub.s32 3, %v1696
        %v1698 = vrot.slane %v1681, %v1697
        %1699 = vrot.lane.b32.xlu0 %v1686, 18
        %v1700 = vpop.permute.xlu0 %1699
        %1701 = vrot.lane.b32.xlu0 %v1690, 18
        %v1702 = vpop.permute.xlu0 %1701
        %1703 = vrot.lane.b32.xlu0 %v1694, 18
        %v1704 = vpop.permute.xlu0 %1703
        %1705 = vrot.lane.b32.xlu0 %v1698, 18
        %v1706 = vpop.permute.xlu0 %1705
        %vm1707 = vcmask 146432
        %v1708 = vsel %vm1707, %v1700, %v1702
        %v1709 = vsel %vm1707, %v1702, %v1704
        %v1710 = vsel %vm1707, %v1704, %v1706
        %v1716 = vmul.f32 %v1011, %v1700
        %v1717 = vmul.f32 %v1003, %v1708
        %v1718 = vmul.f32 %v1004, %v1709
        %v1719 = vmul.f32 %v1005, %v1710
        %v1720 = vmul.f32 %v1012, %v1706
        %s1721 = scalar_lea.vmem %s620, 10
        %v1722 = vld [vmem:[%s1721] sm:$0x3]
        %v1723 = vlaneseq
        %v1724 = vshrl.u32 %v1723, 7
        %v1725 = vsub.s32 0, %v1724
        %v1726 = vrot.slane %v1716, %v1725
        %v1727 = vlaneseq
        %v1728 = vshrl.u32 %v1727, 7
        %v1729 = vsub.s32 0, %v1728
        %v1730 = vrot.slane %v1717, %v1729
        %v1731 = vlaneseq
        %v1732 = vshrl.u32 %v1731, 7
        %v1733 = vsub.s32 0, %v1732
        %v1734 = vrot.slane %v1718, %v1733
        %v1735 = vlaneseq
        %v1736 = vshrl.u32 %v1735, 7
        %v1737 = vsub.s32 0, %v1736
        %v1738 = vrot.slane %v1719, %v1737
        %v1739 = vlaneseq
        %v1740 = vshrl.u32 %v1739, 7
        %v1741 = vsub.s32 0, %v1740
        %v1742 = vrot.slane %v1720, %v1741
        %1744 = vset.pattern.permute.xlu0 0
        %1745 = vperm.xlu0 %1744, %v1722
        %v1746 = vpop.permute.xlu0 %1745
        %v1748 = vmul.f32 %v1726, %v1746
        %v1749 = vmul.f32 %v1730, %v1746
        %v1750 = vmul.f32 %v1734, %v1746
        %v1751 = vmul.f32 %v1738, %v1746
        %v1752 = vmul.f32 %v1742, %v1746
        %1758 = vrot.lane.b32.xlu0 %v1748, 110
        %v1759 = vpop.permute.xlu0 %1758
        %1760 = vrot.lane.b32.xlu0 %v1749, 110
        %v1761 = vpop.permute.xlu0 %1760
        %1762 = vrot.lane.b32.xlu0 %v1750, 110
        %v1763 = vpop.permute.xlu0 %1762
        %1764 = vrot.lane.b32.xlu0 %v1751, 110
        %v1765 = vpop.permute.xlu0 %1764
        %1766 = vrot.lane.b32.xlu0 %v1752, 110
        %v1767 = vpop.permute.xlu0 %1766
        %vm1768 = vcmask 900096
        %v1769 = vsel %vm1768, %v1759, %v1761
        %v1770 = vsel %vm1768, %v1761, %v1763
        %v1771 = vsel %vm1768, %v1763, %v1765
        %v1772 = vsel %vm1768, %v1765, %v1767
        %v1777 = vadd.f32 %v1676, %v1769
        %v1778 = vadd.f32 %v1677, %v1770
        %v1779 = vadd.f32 %v1678, %v1771
        %v1780 = vadd.f32 %v1679, %v1772
        %v1781 = vlaneseq
        %v1782 = vshrl.u32 %v1781, 7
        %v1783 = vsub.s32 1, %v1782
        %v1784 = vrot.slane %v1716, %v1783
        %v1785 = vlaneseq
        %v1786 = vshrl.u32 %v1785, 7
        %v1787 = vsub.s32 1, %v1786
        %v1788 = vrot.slane %v1717, %v1787
        %v1789 = vlaneseq
        %v1790 = vshrl.u32 %v1789, 7
        %v1791 = vsub.s32 1, %v1790
        %v1792 = vrot.slane %v1718, %v1791
        %v1793 = vlaneseq
        %v1794 = vshrl.u32 %v1793, 7
        %v1795 = vsub.s32 1, %v1794
        %v1796 = vrot.slane %v1719, %v1795
        %v1797 = vlaneseq
        %v1798 = vshrl.u32 %v1797, 7
        %v1799 = vsub.s32 1, %v1798
        %v1800 = vrot.slane %v1720, %v1799
        %1801 = vset.pattern.permute.xlu0 1
        %1802 = vperm.xlu0 %1801, %v1722
        %v1803 = vpop.permute.xlu0 %1802
        %v1805 = vmul.f32 %v1784, %v1803
        %v1806 = vmul.f32 %v1788, %v1803
        %v1807 = vmul.f32 %v1792, %v1803
        %v1808 = vmul.f32 %v1796, %v1803
        %v1809 = vmul.f32 %v1800, %v1803
        %1815 = vrot.lane.b32.xlu0 %v1805, 110
        %v1816 = vpop.permute.xlu0 %1815
        %1817 = vrot.lane.b32.xlu0 %v1806, 110
        %v1818 = vpop.permute.xlu0 %1817
        %1819 = vrot.lane.b32.xlu0 %v1807, 110
        %v1820 = vpop.permute.xlu0 %1819
        %1821 = vrot.lane.b32.xlu0 %v1808, 110
        %v1822 = vpop.permute.xlu0 %1821
        %1823 = vrot.lane.b32.xlu0 %v1809, 110
        %v1824 = vpop.permute.xlu0 %1823
        %v1825 = vsel %vm1768, %v1816, %v1818
        %v1826 = vsel %vm1768, %v1818, %v1820
        %v1827 = vsel %vm1768, %v1820, %v1822
        %v1828 = vsel %vm1768, %v1822, %v1824
        %v1833 = vadd.f32 %v1777, %v1825
        %v1834 = vadd.f32 %v1778, %v1826
        %v1835 = vadd.f32 %v1779, %v1827
        %v1836 = vadd.f32 %v1780, %v1828
        %s1837 = scalar_lea.vmem %s0, 6
        %v1838 = vld [vmem:[%s1837] ss:$8 sm:$0xf]
        %v1840 = vlaneseq
        %v1841 = vshrl.u32 %v1840, 7
        %v1842 = vsub.s32 0, %v1841
        %v1843 = vrot.slane %v1838, %v1842
        %v1844 = vlaneseq
        %v1845 = vshrl.u32 %v1844, 7
        %v1846 = vsub.s32 1, %v1845
        %v1847 = vrot.slane %v1838, %v1846
        %v1848 = vlaneseq
        %v1849 = vshrl.u32 %v1848, 7
        %v1850 = vsub.s32 2, %v1849
        %v1851 = vrot.slane %v1838, %v1850
        %v1852 = vlaneseq
        %v1853 = vshrl.u32 %v1852, 7
        %v1854 = vsub.s32 3, %v1853
        %v1855 = vrot.slane %v1838, %v1854
        %1856 = vrot.lane.b32.xlu0 %v1843, 32
        %v1857 = vpop.permute.xlu0 %1856
        %1858 = vrot.lane.b32.xlu0 %v1847, 32
        %v1859 = vpop.permute.xlu0 %1858
        %1860 = vrot.lane.b32.xlu0 %v1851, 32
        %v1861 = vpop.permute.xlu0 %1860
        %1862 = vrot.lane.b32.xlu0 %v1855, 32
        %v1863 = vpop.permute.xlu0 %1862
        %vm1864 = vcmask 261120
        %v1865 = vsel %vm1864, %v1857, %v1859
        %v1866 = vsel %vm1864, %v1859, %v1861
        %v1867 = vsel %vm1864, %v1861, %v1863
        %v1873 = vmul.f32 %v1011, %v1857
        %v1874 = vmul.f32 %v1003, %v1865
        %v1875 = vmul.f32 %v1004, %v1866
        %v1876 = vmul.f32 %v1005, %v1867
        %v1877 = vmul.f32 %v1012, %v1863
        %s1878 = scalar_lea.vmem %s620, 12
        %v1879 = vld [vmem:[%s1878] sm:$0x3]
        %v1880 = vlaneseq
        %v1881 = vshrl.u32 %v1880, 7
        %v1882 = vsub.s32 0, %v1881
        %v1883 = vrot.slane %v1873, %v1882
        %v1884 = vlaneseq
        %v1885 = vshrl.u32 %v1884, 7
        %v1886 = vsub.s32 0, %v1885
        %v1887 = vrot.slane %v1874, %v1886
        %v1888 = vlaneseq
        %v1889 = vshrl.u32 %v1888, 7
        %v1890 = vsub.s32 0, %v1889
        %v1891 = vrot.slane %v1875, %v1890
        %v1892 = vlaneseq
        %v1893 = vshrl.u32 %v1892, 7
        %v1894 = vsub.s32 0, %v1893
        %v1895 = vrot.slane %v1876, %v1894
        %v1896 = vlaneseq
        %v1897 = vshrl.u32 %v1896, 7
        %v1898 = vsub.s32 0, %v1897
        %v1899 = vrot.slane %v1877, %v1898
        %1901 = vset.pattern.permute.xlu0 0
        %1902 = vperm.xlu0 %1901, %v1879
        %v1903 = vpop.permute.xlu0 %1902
        %v1905 = vmul.f32 %v1883, %v1903
        %v1906 = vmul.f32 %v1887, %v1903
        %v1907 = vmul.f32 %v1891, %v1903
        %v1908 = vmul.f32 %v1895, %v1903
        %v1909 = vmul.f32 %v1899, %v1903
        %1915 = vrot.lane.b32.xlu0 %v1905, 96
        %v1916 = vpop.permute.xlu0 %1915
        %1917 = vrot.lane.b32.xlu0 %v1906, 96
        %v1918 = vpop.permute.xlu0 %1917
        %1919 = vrot.lane.b32.xlu0 %v1907, 96
        %v1920 = vpop.permute.xlu0 %1919
        %1921 = vrot.lane.b32.xlu0 %v1908, 96
        %v1922 = vpop.permute.xlu0 %1921
        %1923 = vrot.lane.b32.xlu0 %v1909, 96
        %v1924 = vpop.permute.xlu0 %1923
        %vm1925 = vcmask 785408
        %v1926 = vsel %vm1925, %v1916, %v1918
        %v1927 = vsel %vm1925, %v1918, %v1920
        %v1928 = vsel %vm1925, %v1920, %v1922
        %v1929 = vsel %vm1925, %v1922, %v1924
        %v1934 = vadd.f32 %v1833, %v1926
        %v1935 = vadd.f32 %v1834, %v1927
        %v1936 = vadd.f32 %v1835, %v1928
        %v1937 = vadd.f32 %v1836, %v1929
        %v1938 = vlaneseq
        %v1939 = vshrl.u32 %v1938, 7
        %v1940 = vsub.s32 1, %v1939
        %v1941 = vrot.slane %v1873, %v1940
        %v1942 = vlaneseq
        %v1943 = vshrl.u32 %v1942, 7
        %v1944 = vsub.s32 1, %v1943
        %v1945 = vrot.slane %v1874, %v1944
        %v1946 = vlaneseq
        %v1947 = vshrl.u32 %v1946, 7
        %v1948 = vsub.s32 1, %v1947
        %v1949 = vrot.slane %v1875, %v1948
        %v1950 = vlaneseq
        %v1951 = vshrl.u32 %v1950, 7
        %v1952 = vsub.s32 1, %v1951
        %v1953 = vrot.slane %v1876, %v1952
        %v1954 = vlaneseq
        %v1955 = vshrl.u32 %v1954, 7
        %v1956 = vsub.s32 1, %v1955
        %v1957 = vrot.slane %v1877, %v1956
        %1958 = vset.pattern.permute.xlu0 1
        %1959 = vperm.xlu0 %1958, %v1879
        %v1960 = vpop.permute.xlu0 %1959
        %v1962 = vmul.f32 %v1941, %v1960
        %v1963 = vmul.f32 %v1945, %v1960
        %v1964 = vmul.f32 %v1949, %v1960
        %v1965 = vmul.f32 %v1953, %v1960
        %v1966 = vmul.f32 %v1957, %v1960
        %1972 = vrot.lane.b32.xlu0 %v1962, 96
        %v1973 = vpop.permute.xlu0 %1972
        %1974 = vrot.lane.b32.xlu0 %v1963, 96
        %v1975 = vpop.permute.xlu0 %1974
        %1976 = vrot.lane.b32.xlu0 %v1964, 96
        %v1977 = vpop.permute.xlu0 %1976
        %1978 = vrot.lane.b32.xlu0 %v1965, 96
        %v1979 = vpop.permute.xlu0 %1978
        %1980 = vrot.lane.b32.xlu0 %v1966, 96
        %v1981 = vpop.permute.xlu0 %1980
        %v1982 = vsel %vm1925, %v1973, %v1975
        %v1983 = vsel %vm1925, %v1975, %v1977
        %v1984 = vsel %vm1925, %v1977, %v1979
        %v1985 = vsel %vm1925, %v1979, %v1981
        %v1990 = vadd.f32 %v1934, %v1982
        %v1991 = vadd.f32 %v1935, %v1983
        %v1992 = vadd.f32 %v1936, %v1984
        %v1993 = vadd.f32 %v1937, %v1985
        %s1994 = scalar_lea.vmem %s0, 7
        %v1995 = vld [vmem:[%s1994] ss:$8 sm:$0xf]
        %v1997 = vlaneseq
        %v1998 = vshrl.u32 %v1997, 7
        %v1999 = vsub.s32 0, %v1998
        %v2000 = vrot.slane %v1995, %v1999
        %v2001 = vlaneseq
        %v2002 = vshrl.u32 %v2001, 7
        %v2003 = vsub.s32 1, %v2002
        %v2004 = vrot.slane %v1995, %v2003
        %v2005 = vlaneseq
        %v2006 = vshrl.u32 %v2005, 7
        %v2007 = vsub.s32 2, %v2006
        %v2008 = vrot.slane %v1995, %v2007
        %v2009 = vlaneseq
        %v2010 = vshrl.u32 %v2009, 7
        %v2011 = vsub.s32 3, %v2010
        %v2012 = vrot.slane %v1995, %v2011
        %2013 = vrot.lane.b32.xlu0 %v2000, 33
        %v2014 = vpop.permute.xlu0 %2013
        %2015 = vrot.lane.b32.xlu0 %v2004, 33
        %v2016 = vpop.permute.xlu0 %2015
        %2017 = vrot.lane.b32.xlu0 %v2008, 33
        %v2018 = vpop.permute.xlu0 %2017
        %2019 = vrot.lane.b32.xlu0 %v2012, 33
        %v2020 = vpop.permute.xlu0 %2019
        %vm2021 = vcmask 269312
        %v2022 = vsel %vm2021, %v2014, %v2016
        %v2023 = vsel %vm2021, %v2016, %v2018
        %v2024 = vsel %vm2021, %v2018, %v2020
        %v2030 = vmul.f32 %v1011, %v2014
        %v2031 = vmul.f32 %v1003, %v2022
        %v2032 = vmul.f32 %v1004, %v2023
        %v2033 = vmul.f32 %v1005, %v2024
        %v2034 = vmul.f32 %v1012, %v2020
        %s2035 = scalar_lea.vmem %s620, 14
        %v2036 = vld [vmem:[%s2035] sm:$0x3]
        %v2037 = vlaneseq
        %v2038 = vshrl.u32 %v2037, 7
        %v2039 = vsub.s32 0, %v2038
        %v2040 = vrot.slane %v2030, %v2039
        %v2041 = vlaneseq
        %v2042 = vshrl.u32 %v2041, 7
        %v2043 = vsub.s32 0, %v2042
        %v2044 = vrot.slane %v2031, %v2043
        %v2045 = vlaneseq
        %v2046 = vshrl.u32 %v2045, 7
        %v2047 = vsub.s32 0, %v2046
        %v2048 = vrot.slane %v2032, %v2047
        %v2049 = vlaneseq
        %v2050 = vshrl.u32 %v2049, 7
        %v2051 = vsub.s32 0, %v2050
        %v2052 = vrot.slane %v2033, %v2051
        %v2053 = vlaneseq
        %v2054 = vshrl.u32 %v2053, 7
        %v2055 = vsub.s32 0, %v2054
        %v2056 = vrot.slane %v2034, %v2055
        %2058 = vset.pattern.permute.xlu0 0
        %2059 = vperm.xlu0 %2058, %v2036
        %v2060 = vpop.permute.xlu0 %2059
        %v2062 = vmul.f32 %v2040, %v2060
        %v2063 = vmul.f32 %v2044, %v2060
        %v2064 = vmul.f32 %v2048, %v2060
        %v2065 = vmul.f32 %v2052, %v2060
        %v2066 = vmul.f32 %v2056, %v2060
        %2072 = vrot.lane.b32.xlu0 %v2062, 95
        %v2073 = vpop.permute.xlu0 %2072
        %2074 = vrot.lane.b32.xlu0 %v2063, 95
        %v2075 = vpop.permute.xlu0 %2074
        %2076 = vrot.lane.b32.xlu0 %v2064, 95
        %v2077 = vpop.permute.xlu0 %2076
        %2078 = vrot.lane.b32.xlu0 %v2065, 95
        %v2079 = vpop.permute.xlu0 %2078
        %2080 = vrot.lane.b32.xlu0 %v2066, 95
        %v2081 = vpop.permute.xlu0 %2080
        %vm2082 = vcmask 777216
        %v2083 = vsel %vm2082, %v2073, %v2075
        %v2084 = vsel %vm2082, %v2075, %v2077
        %v2085 = vsel %vm2082, %v2077, %v2079
        %v2086 = vsel %vm2082, %v2079, %v2081
        %v2091 = vadd.f32 %v1990, %v2083
        %v2092 = vadd.f32 %v1991, %v2084
        %v2093 = vadd.f32 %v1992, %v2085
        %v2094 = vadd.f32 %v1993, %v2086
        %v2095 = vlaneseq
        %v2096 = vshrl.u32 %v2095, 7
        %v2097 = vsub.s32 1, %v2096
        %v2098 = vrot.slane %v2030, %v2097
        %v2099 = vlaneseq
        %v2100 = vshrl.u32 %v2099, 7
        %v2101 = vsub.s32 1, %v2100
        %v2102 = vrot.slane %v2031, %v2101
        %v2103 = vlaneseq
        %v2104 = vshrl.u32 %v2103, 7
        %v2105 = vsub.s32 1, %v2104
        %v2106 = vrot.slane %v2032, %v2105
        %v2107 = vlaneseq
        %v2108 = vshrl.u32 %v2107, 7
        %v2109 = vsub.s32 1, %v2108
        %v2110 = vrot.slane %v2033, %v2109
        %v2111 = vlaneseq
        %v2112 = vshrl.u32 %v2111, 7
        %v2113 = vsub.s32 1, %v2112
        %v2114 = vrot.slane %v2034, %v2113
        %2115 = vset.pattern.permute.xlu0 1
        %2116 = vperm.xlu0 %2115, %v2036
        %v2117 = vpop.permute.xlu0 %2116
        %v2119 = vmul.f32 %v2098, %v2117
        %v2120 = vmul.f32 %v2102, %v2117
        %v2121 = vmul.f32 %v2106, %v2117
        %v2122 = vmul.f32 %v2110, %v2117
        %v2123 = vmul.f32 %v2114, %v2117
        %2129 = vrot.lane.b32.xlu0 %v2119, 95
        %v2130 = vpop.permute.xlu0 %2129
        %2131 = vrot.lane.b32.xlu0 %v2120, 95
        %v2132 = vpop.permute.xlu0 %2131
        %2133 = vrot.lane.b32.xlu0 %v2121, 95
        %v2134 = vpop.permute.xlu0 %2133
        %2135 = vrot.lane.b32.xlu0 %v2122, 95
        %v2136 = vpop.permute.xlu0 %2135
        %2137 = vrot.lane.b32.xlu0 %v2123, 95
        %v2138 = vpop.permute.xlu0 %2137
        %v2139 = vsel %vm2082, %v2130, %v2132
        %v2140 = vsel %vm2082, %v2132, %v2134
        %v2141 = vsel %vm2082, %v2134, %v2136
        %v2142 = vsel %vm2082, %v2136, %v2138
        %v2147 = vadd.f32 %v2091, %v2139
        %v2148 = vadd.f32 %v2092, %v2140
        %v2149 = vadd.f32 %v2093, %v2141
        %v2150 = vadd.f32 %v2094, %v2142
        %s2151 = scalar_lea.vmem %s0, 32
        %v2152 = vld [vmem:[%s2151] ss:$8 sm:$0xf]
        %v2154 = vlaneseq
        %v2155 = vshrl.u32 %v2154, 7
        %v2156 = vsub.s32 0, %v2155
        %v2157 = vrot.slane %v2152, %v2156
        %v2158 = vlaneseq
        %v2159 = vshrl.u32 %v2158, 7
        %v2160 = vsub.s32 1, %v2159
        %v2161 = vrot.slane %v2152, %v2160
        %v2162 = vlaneseq
        %v2163 = vshrl.u32 %v2162, 7
        %v2164 = vsub.s32 2, %v2163
        %v2165 = vrot.slane %v2152, %v2164
        %v2166 = vlaneseq
        %v2167 = vshrl.u32 %v2166, 7
        %v2168 = vsub.s32 3, %v2167
        %v2169 = vrot.slane %v2152, %v2168
        %2170 = vrot.lane.b32.xlu0 %v2157, 34
        %v2171 = vpop.permute.xlu0 %2170
        %2172 = vrot.lane.b32.xlu0 %v2161, 34
        %v2173 = vpop.permute.xlu0 %2172
        %2174 = vrot.lane.b32.xlu0 %v2165, 34
        %v2175 = vpop.permute.xlu0 %2174
        %2176 = vrot.lane.b32.xlu0 %v2169, 34
        %v2177 = vpop.permute.xlu0 %2176
        %vm2178 = vcmask 277504
        %v2179 = vsel %vm2178, %v2171, %v2173
        %v2180 = vsel %vm2178, %v2173, %v2175
        %v2181 = vsel %vm2178, %v2175, %v2177
        %v2187 = vmul.f32 %v1011, %v2171
        %v2188 = vmul.f32 %v1003, %v2179
        %v2189 = vmul.f32 %v1004, %v2180
        %v2190 = vmul.f32 %v1005, %v2181
        %v2191 = vmul.f32 %v1012, %v2177
        %s2192 = scalar_lea.vmem %s620, 16
        %v2193 = vld [vmem:[%s2192] sm:$0x3]
        %v2194 = vlaneseq
        %v2195 = vshrl.u32 %v2194, 7
        %v2196 = vsub.s32 0, %v2195
        %v2197 = vrot.slane %v2187, %v2196
        %v2198 = vlaneseq
        %v2199 = vshrl.u32 %v2198, 7
        %v2200 = vsub.s32 0, %v2199
        %v2201 = vrot.slane %v2188, %v2200
        %v2202 = vlaneseq
        %v2203 = vshrl.u32 %v2202, 7
        %v2204 = vsub.s32 0, %v2203
        %v2205 = vrot.slane %v2189, %v2204
        %v2206 = vlaneseq
        %v2207 = vshrl.u32 %v2206, 7
        %v2208 = vsub.s32 0, %v2207
        %v2209 = vrot.slane %v2190, %v2208
        %v2210 = vlaneseq
        %v2211 = vshrl.u32 %v2210, 7
        %v2212 = vsub.s32 0, %v2211
        %v2213 = vrot.slane %v2191, %v2212
        %2215 = vset.pattern.permute.xlu0 0
        %2216 = vperm.xlu0 %2215, %v2193
        %v2217 = vpop.permute.xlu0 %2216
        %v2219 = vmul.f32 %v2197, %v2217
        %v2220 = vmul.f32 %v2201, %v2217
        %v2221 = vmul.f32 %v2205, %v2217
        %v2222 = vmul.f32 %v2209, %v2217
        %v2223 = vmul.f32 %v2213, %v2217
        %2229 = vrot.lane.b32.xlu0 %v2219, 94
        %v2230 = vpop.permute.xlu0 %2229
        %2231 = vrot.lane.b32.xlu0 %v2220, 94
        %v2232 = vpop.permute.xlu0 %2231
        %2233 = vrot.lane.b32.xlu0 %v2221, 94
        %v2234 = vpop.permute.xlu0 %2233
        %2235 = vrot.lane.b32.xlu0 %v2222, 94
        %v2236 = vpop.permute.xlu0 %2235
        %2237 = vrot.lane.b32.xlu0 %v2223, 94
        %v2238 = vpop.permute.xlu0 %2237
        %vm2239 = vcmask 769024
        %v2240 = vsel %vm2239, %v2230, %v2232
        %v2241 = vsel %vm2239, %v2232, %v2234
        %v2242 = vsel %vm2239, %v2234, %v2236
        %v2243 = vsel %vm2239, %v2236, %v2238
        %v2248 = vadd.f32 %v2147, %v2240
        %v2249 = vadd.f32 %v2148, %v2241
        %v2250 = vadd.f32 %v2149, %v2242
        %v2251 = vadd.f32 %v2150, %v2243
        %v2252 = vlaneseq
        %v2253 = vshrl.u32 %v2252, 7
        %v2254 = vsub.s32 1, %v2253
        %v2255 = vrot.slane %v2187, %v2254
        %v2256 = vlaneseq
        %v2257 = vshrl.u32 %v2256, 7
        %v2258 = vsub.s32 1, %v2257
        %v2259 = vrot.slane %v2188, %v2258
        %v2260 = vlaneseq
        %v2261 = vshrl.u32 %v2260, 7
        %v2262 = vsub.s32 1, %v2261
        %v2263 = vrot.slane %v2189, %v2262
        %v2264 = vlaneseq
        %v2265 = vshrl.u32 %v2264, 7
        %v2266 = vsub.s32 1, %v2265
        %v2267 = vrot.slane %v2190, %v2266
        %v2268 = vlaneseq
        %v2269 = vshrl.u32 %v2268, 7
        %v2270 = vsub.s32 1, %v2269
        %v2271 = vrot.slane %v2191, %v2270
        %2272 = vset.pattern.permute.xlu0 1
        %2273 = vperm.xlu0 %2272, %v2193
        %v2274 = vpop.permute.xlu0 %2273
        %v2276 = vmul.f32 %v2255, %v2274
        %v2277 = vmul.f32 %v2259, %v2274
        %v2278 = vmul.f32 %v2263, %v2274
        %v2279 = vmul.f32 %v2267, %v2274
        %v2280 = vmul.f32 %v2271, %v2274
        %2286 = vrot.lane.b32.xlu0 %v2276, 94
        %v2287 = vpop.permute.xlu0 %2286
        %2288 = vrot.lane.b32.xlu0 %v2277, 94
        %v2289 = vpop.permute.xlu0 %2288
        %2290 = vrot.lane.b32.xlu0 %v2278, 94
        %v2291 = vpop.permute.xlu0 %2290
        %2292 = vrot.lane.b32.xlu0 %v2279, 94
        %v2293 = vpop.permute.xlu0 %2292
        %2294 = vrot.lane.b32.xlu0 %v2280, 94
        %v2295 = vpop.permute.xlu0 %2294
        %v2296 = vsel %vm2239, %v2287, %v2289
        %v2297 = vsel %vm2239, %v2289, %v2291
        %v2298 = vsel %vm2239, %v2291, %v2293
        %v2299 = vsel %vm2239, %v2293, %v2295
        %v2304 = vadd.f32 %v2248, %v2296
        %v2305 = vadd.f32 %v2249, %v2297
        %v2306 = vadd.f32 %v2250, %v2298
        %v2307 = vadd.f32 %v2251, %v2299
        %v2308 = vld [vmem:[%s624] sm:$0x3]
        %2310 = vset.pattern.permute.xlu0 0
        %2311 = vperm.xlu0 %2310, %v2308
        %v2312 = vpop.permute.xlu0 %2311
        %v2314 = vadd.f32 %v2304, %v2312
        %v2315 = vadd.f32 %v2305, %v2312
        %v2316 = vadd.f32 %v2306, %v2312
        %v2317 = vadd.f32 %v2307, %v2312
        %v2318 = vld [vmem:[%s628] sm:$0x3]
        %v2319 = vld [vmem:[%s632] sm:$0x3]
        %v2320 = vsel %vm936, %v2314, 0.0
        %v2321 = vsel %vm936, %v2315, 0.0
        %v2322 = vadd.f32 %v2320, %v2321
        %v2323 = vsel %vm936, %v2316, 0.0
        %v2324 = vadd.f32 %v2322, %v2323
        %v2325 = vsel %vm936, %v2317, 0.0
        %v2326 = vadd.f32 %v2324, %v2325
        %2327 = vadd.xlane.f32.xlu0 %v2326
        %v2328 = vpop.xlane.xlu0 %2327
        %v2329 = vmul.f32 %v2328, 0.001953125
        %v2330 = vsub.f32 %v2314, %v2329
        %v2331 = vsub.f32 %v2315, %v2329
        %v2332 = vsub.f32 %v2316, %v2329
        %v2333 = vsub.f32 %v2317, %v2329
        %v2334 = vmul.f32 %v2330, %v2330
        %v2335 = vmul.f32 %v2331, %v2331
        %v2336 = vmul.f32 %v2332, %v2332
        %v2337 = vmul.f32 %v2333, %v2333
        %v2338 = vsel %vm936, %v2334, 0.0
        %v2339 = vsel %vm936, %v2335, 0.0
        %v2340 = vadd.f32 %v2338, %v2339
        %v2341 = vsel %vm936, %v2336, 0.0
        %v2342 = vadd.f32 %v2340, %v2341
        %v2343 = vsel %vm936, %v2337, 0.0
        %v2344 = vadd.f32 %v2342, %v2343
        %2345 = vadd.xlane.f32.xlu0 %v2344
        %v2346 = vpop.xlane.xlu0 %2345
        %v2347 = vmul.f32 %v2346, 0.001953125
        %v2348 = vadd.f32 %v2347, 1e-05
        %v2349 = vrsqrt.pop %v2348
        %v2350 = vmul.f32 %v2318, %v2349
        %2352 = vset.pattern.permute.xlu0 0
        %2353 = vperm.xlu0 %2352, %v2350
        %v2354 = vpop.permute.xlu0 %2353
        %v2356 = vmul.f32 %v2330, %v2354
        %v2357 = vmul.f32 %v2331, %v2354
        %v2358 = vmul.f32 %v2332, %v2354
        %v2359 = vmul.f32 %v2333, %v2354
        %2361 = vset.pattern.permute.xlu0 0
        %2362 = vperm.xlu0 %2361, %v2319
        %v2363 = vpop.permute.xlu0 %2362
        %v2365 = vadd.f32 %v2356, %v2363
        %v2366 = vadd.f32 %v2357, %v2363
        %v2367 = vadd.f32 %v2358, %v2363
        %v2368 = vadd.f32 %v2359, %v2363
        %v2369 = vmax.f32 %v2365, 0.0
        %v2370 = vmax.f32 %v2366, 0.0
        %v2371 = vmax.f32 %v2367, 0.0
        %v2372 = vmax.f32 %v2368, 0.0
        %v2373 = vld [vmem:[%s636] sm:$0xf]
        %v2374 = vlaneseq
        %v2375 = vshrl.u32 %v2374, 7
        %v2376 = vsub.s32 0, %v2375
        %v2377 = vrot.slane %v2369, %v2376
        %v2378 = vlaneseq
        %v2379 = vshrl.u32 %v2378, 7
        %v2380 = vsub.s32 0, %v2379
        %v2381 = vrot.slane %v2370, %v2380
        %v2382 = vlaneseq
        %v2383 = vshrl.u32 %v2382, 7
        %v2384 = vsub.s32 0, %v2383
        %v2385 = vrot.slane %v2371, %v2384
        %v2386 = vlaneseq
        %v2387 = vshrl.u32 %v2386, 7
        %v2388 = vsub.s32 0, %v2387
        %v2389 = vrot.slane %v2372, %v2388
        %2391 = vset.pattern.permute.xlu0 0
        %2392 = vperm.xlu0 %2391, %v2373
        %v2393 = vpop.permute.xlu0 %2392
        %v2395 = vmul.f32 %v2377, %v2393
        %v2396 = vmul.f32 %v2381, %v2393
        %v2397 = vmul.f32 %v2385, %v2393
        %v2398 = vmul.f32 %v2389, %v2393
        %v2399 = vlaneseq
        %v2400 = vshrl.u32 %v2399, 7
        %v2401 = vsub.s32 1, %v2400
        %v2402 = vrot.slane %v2369, %v2401
        %v2403 = vlaneseq
        %v2404 = vshrl.u32 %v2403, 7
        %v2405 = vsub.s32 1, %v2404
        %v2406 = vrot.slane %v2370, %v2405
        %v2407 = vlaneseq
        %v2408 = vshrl.u32 %v2407, 7
        %v2409 = vsub.s32 1, %v2408
        %v2410 = vrot.slane %v2371, %v2409
        %v2411 = vlaneseq
        %v2412 = vshrl.u32 %v2411, 7
        %v2413 = vsub.s32 1, %v2412
        %v2414 = vrot.slane %v2372, %v2413
        %2415 = vset.pattern.permute.xlu0 1
        %2416 = vperm.xlu0 %2415, %v2373
        %v2417 = vpop.permute.xlu0 %2416
        %v2419 = vmul.f32 %v2402, %v2417
        %v2420 = vmul.f32 %v2406, %v2417
        %v2421 = vmul.f32 %v2410, %v2417
        %v2422 = vmul.f32 %v2414, %v2417
        %v2423 = vadd.f32 %v2395, %v2419
        %v2424 = vadd.f32 %v2396, %v2420
        %v2425 = vadd.f32 %v2397, %v2421
        %v2426 = vadd.f32 %v2398, %v2422
        %v2427 = vld [vmem:[%s640] sm:$0xf]
        %2429 = vset.pattern.permute.xlu0 0
        %2430 = vperm.xlu0 %2429, %v2427
        %v2431 = vpop.permute.xlu0 %2430
        %v2433 = vadd.f32 %v2423, %v2431
        %v2434 = vadd.f32 %v2424, %v2431
        %v2435 = vadd.f32 %v2425, %v2431
        %v2436 = vadd.f32 %v2426, %v2431
        %v2437 = vadd.f32 %v2433, %v649
        %v2438 = vadd.f32 %v2434, %v655
        %v2439 = vadd.f32 %v2435, %v650
        %v2440 = vadd.f32 %v2436, %v656
        %v2445 = vcombine.low %v2437, %v2438
        %v2446 = vcombine.low %v2439, %v2440
        %2449 = vst [vmem:[#allocation2] sm:$0xff] %v2445
        %2450 = vst [vmem:[#allocation2 + $0x8] sm:$0xff] %v2446
        %p2451 = scmp.eq.s32.totalorder %s26, 1
        // Predicated region
        $region81: #{tpu_custom_call.1} parent=75 // pred_check
          %p2452 = pneg %p2451
        $region82: #{tpu_custom_call.1} parent=75 // pred_check_branch
          %2454 = sbr.rel (%p2452) target = $region84
        $region83: #{tpu_custom_call.1} parent=75 // pred_region
          %2455 = vst [vmem:[#allocation3] sm:$0xff] %v2445
          %2456 = vst [vmem:[#allocation3 + $0x8] sm:$0xff] %v2446
        $region84: #{tpu_custom_call.1} parent=75 // pred_fallthru
          _
        // Predicated region
        $region85: #{tpu_custom_call.1} parent=75 // pred_check
          %p2457 = pneg %p393
        $region86: #{tpu_custom_call.1} parent=75 // pred_check_branch
          %2459 = sbr.rel (%p2457) target = $region88
        $region87: #{tpu_custom_call.1} parent=75 // pred_region
          %s2461 = ssub.s32 256, 256
          %2462 = vsyncadd [#allocation4], %s2461
          %s2464 = sshll.u32 [#allocation3], 4
          %s2465 = int_to_ptr.vmem [resolvable:$true] %s2464
          %2467 = dma.vmem_to_hbm [thread:$0]  %s2465, 256, %s14, [#allocation4]
        $region88: #{tpu_custom_call.1} parent=75 // pred_fallthru
          _
        // Predicated region
        $region89: #{tpu_custom_call.1} parent=75 // pred_check
          %p2468 = pneg %p393
        $region90: #{tpu_custom_call.1} parent=75 // pred_check_branch
          %2470 = sbr.rel (%p2468) target = $region92
        $region91: #{tpu_custom_call.1} parent=75 // pred_region
          %2471 = dma.done [#allocation4], 256
        $region92: #{tpu_custom_call.1} parent=75 // pred_fallthru
          _
      $region76: #{tpu_custom_call.1} parent=5 // pred_fallthru
        _
      %p2472 = scmp.le.s32.totalorder 2, %s21
      // Predicated region
      $region93: #{tpu_custom_call.1} parent=5 // pred_check
        %p2473 = pneg %p2472
      $region94: #{tpu_custom_call.1} parent=5 // pred_check_branch
        %2475 = sbr.rel (%p2473) target = $region96
      $region95: #{tpu_custom_call.1} parent=5 // pred_region
        %s2476 = ssub.s32 %s21, 2
      $region96: #{tpu_custom_call.1} parent=5 // pred_fallthru
        _
    $region6: #{tpu_custom_call.1} parent=1 // loop_footer
      %s25 = sadd.s32 1, %s21
    $region7: #{tpu_custom_call.1} parent=1 // loop_footer_branch
      %20 = sbr.rel target = $region3
    $region8: #{tpu_custom_call.1} parent=1 // loop_exit
      _
    %2477 = vsyncpa [#allocation4], 1
    %s2478 = scalar_lea.sflag [#allocation4], 1
    %2479 = vsyncpa %s2478, 1

</llo_original>
